<compile_context>
chip_gen: v7x
topology: tpu7x:2x2x1
jax: 0.10.0
libtpu: 0.0.40
codegen_flags: <defaults>
</compile_context>

<pallas_src>
import jax
import jax.numpy as jnp
import numpy as np
from jax.experimental import pallas as pl
from jax.experimental.pallas import tpu as pltpu

# ---- module hyper-parameters (small but TPU-tile-friendly) -------------------
LATENT_SIZE    = 128   # latent_size
DLATENT_SIZE   = 128   # dlatent_size
MAPPING_FMAPS  = 128   # mapping_fmaps
MAPPING_LAYERS = 8     # mapping_layers
MAPPING_LRMUL  = 0.01  # mapping_lrmul
GAIN           = float(np.sqrt(2.0))   # 'lrelu' nonlinearity gain
LRELU_SLOPE    = 0.2
PIXELNORM_EPS  = 1e-8
USE_WSCALE     = True

# Kernel stores all layer weights as one (L, 128, 128) stack.
assert LATENT_SIZE == MAPPING_FMAPS == DLATENT_SIZE


def _runtime_w_muls():
    """Per-layer runtime weight multiplier (use_wscale=True): he_std * lrmul."""
    muls = []
    for l in range(MAPPING_LAYERS):
        fan_in = LATENT_SIZE if l == 0 else MAPPING_FMAPS
        he_std = GAIN * fan_in ** (-0.5)
        muls.append(he_std * MAPPING_LRMUL if USE_WSCALE else MAPPING_LRMUL)
    return tuple(muls)


W_MULS = _runtime_w_muls()
B_MUL = MAPPING_LRMUL   # bias runtime multiplier (b_mul = lrmul)


# ---- parameter preparation (fold runtime scales ONCE, cast weights to bf16) --
def fold_params(weights_t, biases):
    """weights_t: (L, IN, OUT) f32, biases: (L, OUT) f32 -> (bf16 weights, f32 biases)."""
    w_muls = jnp.asarray(W_MULS, jnp.float32)[:, None, None]
    w_folded = (weights_t.astype(jnp.float32) * w_muls).astype(jnp.bfloat16)
    b_folded = (biases.astype(jnp.float32) * B_MUL)
    return w_folded, b_folded


# ---- Pallas kernel factory ----------------------------------------------------
# n_chunks independent M-chunks are processed "in parallel" inside one grid step so
# the MXU matmul of one chunk overlaps the VPU epilogue of the other(s).
def _make_kernel(n_chunks, chunk_rows):
    def gmapping_kernel(x_ref, w_ref, b_ref, o_ref):
        # PixelNormLayer: x * rsqrt(mean(x^2, dim=1, keepdim=True) + eps), per chunk.
        xs = []
        for c in range(n_chunks):
            xc = x_ref[pl.ds(c * chunk_rows, chunk_rows), :].astype(jnp.float32)
            xc = xc * jax.lax.rsqrt(jnp.mean(xc * xc, axis=1, keepdims=True)
                                    + PIXELNORM_EPS)
            xs.append(xc)
        # dense0 .. dense7, each followed by LeakyReLU(0.2). Scales are pre-folded.
        for l in range(MAPPING_LAYERS):           # static unroll (8 iters)
            w = w_ref[l]                          # (128, 128) bf16, grid-invariant
            b = b_ref[l][None, :]                 # (1, 128)  f32
            zs = []
            for c in range(n_chunks):             # independent MXU work per chunk
                y = jnp.dot(xs[c].astype(jnp.bfloat16), w,
                            preferred_element_type=jnp.float32)   # f32 MXU accumulate
                zs.append(y + b)
            # LeakyReLU(0.2): max(z, 0.2*z) — single VALU op per element.
            xs = [jnp.maximum(z, LRELU_SLOPE * z) for z in zs]
        for c in range(n_chunks):
            o_ref[pl.ds(c * chunk_rows, chunk_rows), :] = xs[c].astype(o_ref.dtype)
    return gmapping_kernel


# ---- tiling policy ------------------------------------------------------------
def _round_up(n, m):
    return ((n + m - 1) // m) * m


def _cdiv(a, b):
    return (a + b - 1) // b


_TILE_CAP = 512       # rows per grid step on the large-batch path (multiple of 128)
_ALIGN    = 16        # 2 chunks x 8 sublanes


def _num_tensorcores():
    """2 on v7x (2 TCs/chip), else 1. Detection failure falls back to the safe path."""
    try:
        kind = jax.devices()[0].device_kind.lower().replace(" ", "")
    except Exception:
        kind = ""
    return 2 if ("v7" in kind or "tpu7" in kind) else 1


def _choose_tile(batch, n_cores):
    """Returns (tile_b, grid_steps)."""
    b = _round_up(max(batch, _ALIGN), _ALIGN)
    if n_cores <= 1:
        # v5e / v6e: grid steps run serially on one TC -> one resident step up to the
        # cap (saves per-step overhead), then 512-row (128-aligned M) tiles.
        if b <= _TILE_CAP:
            return b, 1
        return _TILE_CAP, _cdiv(b, _TILE_CAP)
    # v7x: give both TensorCores work for B > 32 and keep the grid even so the
    # core-parallel sharding balances.
    if b <= 32:
        return b, 1
    if b <= 2 * _TILE_CAP:
        return _round_up(_cdiv(b, 2), _ALIGN), 2
    grid = 2 * _cdiv(b, 2 * _TILE_CAP)
    return _round_up(_cdiv(b, grid), _ALIGN), grid


# ---- wrapper -------------------------------------------------------------------
def gmapping_forward(x, w_folded, b_folded, dlatent_broadcast=None,
                     out_dtype=jnp.float32):
    B, d_in = x.shape
    assert d_in == LATENT_SIZE
    n_cores = _num_tensorcores()
    tile_b, grid = _choose_tile(B, n_cores)
    b_pad = tile_b * grid
    if b_pad != B:
        x = jnp.pad(x, ((0, b_pad - B), (0, 0)))   # zero rows are harmless, sliced off

    n_chunks = 2 if (tile_b % 16 == 0) else 1
    chunk_rows = tile_b // n_chunks
    kernel = _make_kernel(n_chunks, chunk_rows)

    if n_cores > 1 and grid > 1:
        # Only core_parallel actually shards grid steps across the two v7x TCs.
        dim_sem = (getattr(pltpu, "CORE_PARALLEL", "parallel"),)
    else:
        dim_sem = ("arbitrary",)

    out = pl.pallas_call(
        kernel,
        out_shape=jax.ShapeDtypeStruct((b_pad, DLATENT_SIZE), out_dtype),
        grid_spec=pl.GridSpec(
            grid=(grid,),
            in_specs=[
                pl.BlockSpec((tile_b, LATENT_SIZE), lambda i: (i, 0)),
                pl.BlockSpec((MAPPING_LAYERS, MAPPING_FMAPS, MAPPING_FMAPS),
                             lambda i: (0, 0, 0)),           # grid-invariant weights
                pl.BlockSpec((MAPPING_LAYERS, MAPPING_FMAPS), lambda i: (0, 0)),
            ],
            out_specs=pl.BlockSpec((tile_b, DLATENT_SIZE), lambda i: (i, 0)),
        ),
        compiler_params=pltpu.CompilerParams(dimension_semantics=dim_sem),
    )(x, w_folded, b_folded)

    out = out[:B]
    if dlatent_broadcast is not None:
        # x.unsqueeze(1).expand(-1, dlatent_broadcast, -1) -> plain-JAX broadcast (glue)
        out = jnp.broadcast_to(out[:, None, :], (B, dlatent_broadcast, DLATENT_SIZE))
    return out


# ---- deterministic parameter init (matches EqualizedLinear __init__) ----------
def init_params(key):
    init_std = (1.0 / MAPPING_LRMUL) if USE_WSCALE else (GAIN * LATENT_SIZE ** -0.5) / MAPPING_LRMUL
    ws = []
    for l in range(MAPPING_LAYERS):
        key, sub = jax.random.split(key)
        fan_in = LATENT_SIZE if l == 0 else MAPPING_FMAPS
        fan_out = DLATENT_SIZE if l == MAPPING_LAYERS - 1 else MAPPING_FMAPS
        w = jax.random.normal(sub, (fan_out, fan_in), jnp.float32) * init_std  # torch (out,in)
        ws.append(w.T)                                                         # store (in,out)
    weights_t = jnp.stack(ws, axis=0)                        # (L, IN, OUT) f32
    key, sub = jax.random.split(key)
    biases = jax.random.normal(sub, (MAPPING_LAYERS, MAPPING_FMAPS), jnp.float32)
    return weights_t, biases


# ---- references ----------------------------------------------------------------
def gmapping_ref(x, weights_t, biases):
    """Exact module semantics in f32 (wscale/lrmul applied at runtime)."""
    x = x * jax.lax.rsqrt(jnp.mean(x * x, axis=1, keepdims=True) + PIXELNORM_EPS)
    for l in range(MAPPING_LAYERS):
        y = jnp.dot(x, weights_t[l] * W_MULS[l],
                    precision=jax.lax.Precision.HIGHEST) + biases[l] * B_MUL
        x = jnp.where(y >= 0, y, LRELU_SLOPE * y)
    return x


def gmapping_ref_mixed(x, w_folded, b_folded):
    """Same mixed precision (bf16 matmul, f32 accumulate) as the kernel, in plain JAX."""
    x = x * jax.lax.rsqrt(jnp.mean(x * x, axis=1, keepdims=True) + PIXELNORM_EPS)
    for l in range(MAPPING_LAYERS):
        y = jnp.dot(x.astype(jnp.bfloat16), w_folded[l],
                    preferred_element_type=jnp.float32) + b_folded[l][None, :]
        x = jnp.where(y >= 0, y, LRELU_SLOPE * y)
    return x


if __name__ == "__main__":
    key = jax.random.PRNGKey(0)
    k_param, k_x1, k_x2 = jax.random.split(key, 3)
    weights_t, biases = init_params(k_param)
    w_folded, b_folded = fold_params(weights_t, biases)   # done once, outside the kernel

    # --- small serving-style batch: single resident grid step + dlatent broadcast ---
    B1 = 16
    dl_b = 4
    x1 = jax.random.normal(k_x1, (B1, LATENT_SIZE), jnp.float32)
    out1 = jax.block_until_ready(gmapping_forward(x1, w_folded, b_folded,
                                                  dlatent_broadcast=dl_b))
    assert out1.shape == (B1, dl_b, DLATENT_SIZE)
    np.testing.assert_allclose(np.asarray(out1[:, 0, :]),
                               np.asarray(gmapping_ref_mixed(x1, w_folded, b_folded)),
                               rtol=1e-2, atol=1e-2)
    np.testing.assert_allclose(np.asarray(out1[:, 0, :]),
                               np.asarray(gmapping_ref(x1, weights_t, biases)),
                               rtol=1e-1, atol=1e-1)   # bf16 drift through 8 chained matmuls

    # --- larger, non-multiple batch: exercises zero-pad (single step on v5e/v6e,
    #     two core-parallel steps on v7x) ---
    B2 = 200
    x2 = jax.random.normal(k_x2, (B2, LATENT_SIZE), jnp.float32)
    out2 = jax.block_until_ready(gmapping_forward(x2, w_folded, b_folded))
    assert out2.shape == (B2, DLATENT_SIZE)
    np.testing.assert_allclose(np.asarray(out2),
                               np.asarray(gmapping_ref_mixed(x2, w_folded, b_folded)),
                               rtol=1e-2, atol=1e-2)
    np.testing.assert_allclose(np.asarray(out2),
                               np.asarray(gmapping_ref(x2, weights_t, biases)),
                               rtol=1e-1, atol=1e-1)

    # --- optional bf16 dlatent output (halves activation HBM traffic downstream) ---
    out3 = jax.block_until_ready(gmapping_forward(x2, w_folded, b_folded,
                                                  out_dtype=jnp.bfloat16))
    assert out3.dtype == jnp.bfloat16 and out3.shape == (B2, DLATENT_SIZE)
    np.testing.assert_allclose(np.asarray(out3.astype(jnp.float32)),
                               np.asarray(gmapping_ref_mixed(x2, w_folded, b_folded)),
                               rtol=3e-2, atol=3e-2)

    print("KERNEL_OK")
</pallas_src>

<mosaic_0001>
module attributes {stable_mosaic.version = 11 : i64} {
  func.func @gmapping_kernel(%arg0: i32, %arg1: memref<16x128xf32, #tpu.memory_space<vmem>>, %arg2: memref<8x128x128xbf16, #tpu.memory_space<vmem>>, %arg3: memref<8x128xf32, #tpu.memory_space<vmem>>, %arg4: memref<16x128xf32, #tpu.memory_space<vmem>>) attributes {dimension_semantics = [#tpu.dimension_semantics<arbitrary>], iteration_bounds = array<i64: 1>, scalar_prefetch = 0 : i64, scratch_operands = 0 : i64, tpu.core_type = #tpu.core_type<tc>, window_params = [{transform_indices = @transform_0, window_bounds = array<i64: 16, 128>}, {pipeline_mode = #tpu.pipeline_mode<synchronous>, transform_indices = @transform_1, window_bounds = array<i64: 8, 128, 128>}, {pipeline_mode = #tpu.pipeline_mode<synchronous>, transform_indices = @transform_2, window_bounds = array<i64: 8, 128>}, {transform_indices = @transform_3, window_bounds = array<i64: 16, 128>}]} {
    %c0 = arith.constant 0 : index
    %c0_0 = arith.constant 0 : index
    %0 = vector.load %arg1[%c0, %c0_0] : memref<16x128xf32, #tpu.memory_space<vmem>>, vector<8x128xf32>
    %1 = arith.mulf %0, %0 : vector<8x128xf32>
    %cst = arith.constant dense<0.000000e+00> : vector<8xf32>
    %2 = vector.multi_reduction <add>, %1, %cst [1] : vector<8x128xf32> to vector<8xf32>
    %3 = vector.shape_cast %2 : vector<8xf32> to vector<8x1xf32>
    %cst_1 = arith.constant 1.280000e+02 : f32
    %4 = vector.broadcast %cst_1 : f32 to vector<8x1xf32>
    %5 = arith.divf %3, %4 : vector<8x1xf32>
    %cst_2 = arith.constant 9.99999993E-9 : f32
    %6 = vector.broadcast %cst_2 : f32 to vector<8x1xf32>
    %7 = arith.addf %5, %6 : vector<8x1xf32>
    %8 = math.rsqrt %7 : vector<8x1xf32>
    %9 = vector.broadcast %8 : vector<8x1xf32> to vector<8x128xf32>
    %10 = arith.mulf %0, %9 : vector<8x128xf32>
    %c8 = arith.constant 8 : index
    %c0_3 = arith.constant 0 : index
    %11 = vector.load %arg1[%c8, %c0_3] : memref<16x128xf32, #tpu.memory_space<vmem>>, vector<8x128xf32>
    %12 = arith.mulf %11, %11 : vector<8x128xf32>
    %cst_4 = arith.constant dense<0.000000e+00> : vector<8xf32>
    %13 = vector.multi_reduction <add>, %12, %cst_4 [1] : vector<8x128xf32> to vector<8xf32>
    %14 = vector.shape_cast %13 : vector<8xf32> to vector<8x1xf32>
    %cst_5 = arith.constant 1.280000e+02 : f32
    %15 = vector.broadcast %cst_5 : f32 to vector<8x1xf32>
    %16 = arith.divf %14, %15 : vector<8x1xf32>
    %cst_6 = arith.constant 9.99999993E-9 : f32
    %17 = vector.broadcast %cst_6 : f32 to vector<8x1xf32>
    %18 = arith.addf %16, %17 : vector<8x1xf32>
    %19 = math.rsqrt %18 : vector<8x1xf32>
    %20 = vector.broadcast %19 : vector<8x1xf32> to vector<8x128xf32>
    %21 = arith.mulf %11, %20 : vector<8x128xf32>
    %c0_7 = arith.constant 0 : index
    %c0_8 = arith.constant 0 : index
    %c0_9 = arith.constant 0 : index
    %22 = vector.load %arg2[%c0_7, %c0_8, %c0_9] : memref<8x128x128xbf16, #tpu.memory_space<vmem>>, vector<1x128x128xbf16>
    %23 = vector.shape_cast %22 : vector<1x128x128xbf16> to vector<128x128xbf16>
    %c0_10 = arith.constant 0 : index
    %c0_11 = arith.constant 0 : index
    %24 = vector.load %arg3[%c0_10, %c0_11] : memref<8x128xf32, #tpu.memory_space<vmem>>, vector<1x128xf32>
    %25 = vector.shape_cast %24 : vector<1x128xf32> to vector<128xf32>
    %26 = vector.shape_cast %25 : vector<128xf32> to vector<1x128xf32>
    %27 = arith.truncf %10 : vector<8x128xf32> to vector<8x128xbf16>
    %cst_12 = arith.constant dense<0.000000e+00> : vector<8x128xf32>
    %28 = tpu.matmul %27, %23, %cst_12 {dimension_numbers = #tpu.dot_dimension_numbers<[1], [0], [0], [1], [0, 0, 1, 1], [], []>} : vector<8x128xbf16>, vector<128x128xbf16>, vector<8x128xf32> -> vector<8x128xf32>
    %29 = vector.broadcast %26 : vector<1x128xf32> to vector<8x128xf32>
    %30 = arith.addf %28, %29 : vector<8x128xf32>
    %31 = arith.truncf %21 : vector<8x128xf32> to vector<8x128xbf16>
    %cst_13 = arith.constant dense<0.000000e+00> : vector<8x128xf32>
    %32 = tpu.matmul %31, %23, %cst_13 {dimension_numbers = #tpu.dot_dimension_numbers<[1], [0], [0], [1], [0, 0, 1, 1], [], []>} : vector<8x128xbf16>, vector<128x128xbf16>, vector<8x128xf32> -> vector<8x128xf32>
    %33 = vector.broadcast %26 : vector<1x128xf32> to vector<8x128xf32>
    %34 = arith.addf %32, %33 : vector<8x128xf32>
    %cst_14 = arith.constant 2.000000e-01 : f32
    %35 = vector.broadcast %cst_14 : f32 to vector<8x128xf32>
    %36 = arith.mulf %35, %30 : vector<8x128xf32>
    %37 = arith.maximumf %30, %36 : vector<8x128xf32>
    %cst_15 = arith.constant 2.000000e-01 : f32
    %38 = vector.broadcast %cst_15 : f32 to vector<8x128xf32>
    %39 = arith.mulf %38, %34 : vector<8x128xf32>
    %40 = arith.maximumf %34, %39 : vector<8x128xf32>
    %c1 = arith.constant 1 : index
    %c0_16 = arith.constant 0 : index
    %c0_17 = arith.constant 0 : index
    %41 = vector.load %arg2[%c1, %c0_16, %c0_17] : memref<8x128x128xbf16, #tpu.memory_space<vmem>>, vector<1x128x128xbf16>
    %42 = vector.shape_cast %41 : vector<1x128x128xbf16> to vector<128x128xbf16>
    %c1_18 = arith.constant 1 : index
    %c0_19 = arith.constant 0 : index
    %43 = vector.load %arg3[%c1_18, %c0_19] : memref<8x128xf32, #tpu.memory_space<vmem>>, vector<1x128xf32>
    %44 = vector.shape_cast %43 : vector<1x128xf32> to vector<128xf32>
    %45 = vector.shape_cast %44 : vector<128xf32> to vector<1x128xf32>
    %46 = arith.truncf %37 : vector<8x128xf32> to vector<8x128xbf16>
    %cst_20 = arith.constant dense<0.000000e+00> : vector<8x128xf32>
    %47 = tpu.matmul %46, %42, %cst_20 {dimension_numbers = #tpu.dot_dimension_numbers<[1], [0], [0], [1], [0, 0, 1, 1], [], []>} : vector<8x128xbf16>, vector<128x128xbf16>, vector<8x128xf32> -> vector<8x128xf32>
    %48 = vector.broadcast %45 : vector<1x128xf32> to vector<8x128xf32>
    %49 = arith.addf %47, %48 : vector<8x128xf32>
    %50 = arith.truncf %40 : vector<8x128xf32> to vector<8x128xbf16>
    %cst_21 = arith.constant dense<0.000000e+00> : vector<8x128xf32>
    %51 = tpu.matmul %50, %42, %cst_21 {dimension_numbers = #tpu.dot_dimension_numbers<[1], [0], [0], [1], [0, 0, 1, 1], [], []>} : vector<8x128xbf16>, vector<128x128xbf16>, vector<8x128xf32> -> vector<8x128xf32>
    %52 = vector.broadcast %45 : vector<1x128xf32> to vector<8x128xf32>
    %53 = arith.addf %51, %52 : vector<8x128xf32>
    %cst_22 = arith.constant 2.000000e-01 : f32
    %54 = vector.broadcast %cst_22 : f32 to vector<8x128xf32>
    %55 = arith.mulf %54, %49 : vector<8x128xf32>
    %56 = arith.maximumf %49, %55 : vector<8x128xf32>
    %cst_23 = arith.constant 2.000000e-01 : f32
    %57 = vector.broadcast %cst_23 : f32 to vector<8x128xf32>
    %58 = arith.mulf %57, %53 : vector<8x128xf32>
    %59 = arith.maximumf %53, %58 : vector<8x128xf32>
    %c2 = arith.constant 2 : index
    %c0_24 = arith.constant 0 : index
    %c0_25 = arith.constant 0 : index
    %60 = vector.load %arg2[%c2, %c0_24, %c0_25] : memref<8x128x128xbf16, #tpu.memory_space<vmem>>, vector<1x128x128xbf16>
    %61 = vector.shape_cast %60 : vector<1x128x128xbf16> to vector<128x128xbf16>
    %c2_26 = arith.constant 2 : index
    %c0_27 = arith.constant 0 : index
    %62 = vector.load %arg3[%c2_26, %c0_27] : memref<8x128xf32, #tpu.memory_space<vmem>>, vector<1x128xf32>
    %63 = vector.shape_cast %62 : vector<1x128xf32> to vector<128xf32>
    %64 = vector.shape_cast %63 : vector<128xf32> to vector<1x128xf32>
    %65 = arith.truncf %56 : vector<8x128xf32> to vector<8x128xbf16>
    %cst_28 = arith.constant dense<0.000000e+00> : vector<8x128xf32>
    %66 = tpu.matmul %65, %61, %cst_28 {dimension_numbers = #tpu.dot_dimension_numbers<[1], [0], [0], [1], [0, 0, 1, 1], [], []>} : vector<8x128xbf16>, vector<128x128xbf16>, vector<8x128xf32> -> vector<8x128xf32>
    %67 = vector.broadcast %64 : vector<1x128xf32> to vector<8x128xf32>
    %68 = arith.addf %66, %67 : vector<8x128xf32>
    %69 = arith.truncf %59 : vector<8x128xf32> to vector<8x128xbf16>
    %cst_29 = arith.constant dense<0.000000e+00> : vector<8x128xf32>
    %70 = tpu.matmul %69, %61, %cst_29 {dimension_numbers = #tpu.dot_dimension_numbers<[1], [0], [0], [1], [0, 0, 1, 1], [], []>} : vector<8x128xbf16>, vector<128x128xbf16>, vector<8x128xf32> -> vector<8x128xf32>
    %71 = vector.broadcast %64 : vector<1x128xf32> to vector<8x128xf32>
    %72 = arith.addf %70, %71 : vector<8x128xf32>
    %cst_30 = arith.constant 2.000000e-01 : f32
    %73 = vector.broadcast %cst_30 : f32 to vector<8x128xf32>
    %74 = arith.mulf %73, %68 : vector<8x128xf32>
    %75 = arith.maximumf %68, %74 : vector<8x128xf32>
    %cst_31 = arith.constant 2.000000e-01 : f32
    %76 = vector.broadcast %cst_31 : f32 to vector<8x128xf32>
    %77 = arith.mulf %76, %72 : vector<8x128xf32>
    %78 = arith.maximumf %72, %77 : vector<8x128xf32>
    %c3 = arith.constant 3 : index
    %c0_32 = arith.constant 0 : index
    %c0_33 = arith.constant 0 : index
    %79 = vector.load %arg2[%c3, %c0_32, %c0_33] : memref<8x128x128xbf16, #tpu.memory_space<vmem>>, vector<1x128x128xbf16>
    %80 = vector.shape_cast %79 : vector<1x128x128xbf16> to vector<128x128xbf16>
    %c3_34 = arith.constant 3 : index
    %c0_35 = arith.constant 0 : index
    %81 = vector.load %arg3[%c3_34, %c0_35] : memref<8x128xf32, #tpu.memory_space<vmem>>, vector<1x128xf32>
    %82 = vector.shape_cast %81 : vector<1x128xf32> to vector<128xf32>
    %83 = vector.shape_cast %82 : vector<128xf32> to vector<1x128xf32>
    %84 = arith.truncf %75 : vector<8x128xf32> to vector<8x128xbf16>
    %cst_36 = arith.constant dense<0.000000e+00> : vector<8x128xf32>
    %85 = tpu.matmul %84, %80, %cst_36 {dimension_numbers = #tpu.dot_dimension_numbers<[1], [0], [0], [1], [0, 0, 1, 1], [], []>} : vector<8x128xbf16>, vector<128x128xbf16>, vector<8x128xf32> -> vector<8x128xf32>
    %86 = vector.broadcast %83 : vector<1x128xf32> to vector<8x128xf32>
    %87 = arith.addf %85, %86 : vector<8x128xf32>
    %88 = arith.truncf %78 : vector<8x128xf32> to vector<8x128xbf16>
    %cst_37 = arith.constant dense<0.000000e+00> : vector<8x128xf32>
    %89 = tpu.matmul %88, %80, %cst_37 {dimension_numbers = #tpu.dot_dimension_numbers<[1], [0], [0], [1], [0, 0, 1, 1], [], []>} : vector<8x128xbf16>, vector<128x128xbf16>, vector<8x128xf32> -> vector<8x128xf32>
    %90 = vector.broadcast %83 : vector<1x128xf32> to vector<8x128xf32>
    %91 = arith.addf %89, %90 : vector<8x128xf32>
    %cst_38 = arith.constant 2.000000e-01 : f32
    %92 = vector.broadcast %cst_38 : f32 to vector<8x128xf32>
    %93 = arith.mulf %92, %87 : vector<8x128xf32>
    %94 = arith.maximumf %87, %93 : vector<8x128xf32>
    %cst_39 = arith.constant 2.000000e-01 : f32
    %95 = vector.broadcast %cst_39 : f32 to vector<8x128xf32>
    %96 = arith.mulf %95, %91 : vector<8x128xf32>
    %97 = arith.maximumf %91, %96 : vector<8x128xf32>
    %c4 = arith.constant 4 : index
    %c0_40 = arith.constant 0 : index
    %c0_41 = arith.constant 0 : index
    %98 = vector.load %arg2[%c4, %c0_40, %c0_41] : memref<8x128x128xbf16, #tpu.memory_space<vmem>>, vector<1x128x128xbf16>
    %99 = vector.shape_cast %98 : vector<1x128x128xbf16> to vector<128x128xbf16>
    %c4_42 = arith.constant 4 : index
    %c0_43 = arith.constant 0 : index
    %100 = vector.load %arg3[%c4_42, %c0_43] : memref<8x128xf32, #tpu.memory_space<vmem>>, vector<1x128xf32>
    %101 = vector.shape_cast %100 : vector<1x128xf32> to vector<128xf32>
    %102 = vector.shape_cast %101 : vector<128xf32> to vector<1x128xf32>
    %103 = arith.truncf %94 : vector<8x128xf32> to vector<8x128xbf16>
    %cst_44 = arith.constant dense<0.000000e+00> : vector<8x128xf32>
    %104 = tpu.matmul %103, %99, %cst_44 {dimension_numbers = #tpu.dot_dimension_numbers<[1], [0], [0], [1], [0, 0, 1, 1], [], []>} : vector<8x128xbf16>, vector<128x128xbf16>, vector<8x128xf32> -> vector<8x128xf32>
    %105 = vector.broadcast %102 : vector<1x128xf32> to vector<8x128xf32>
    %106 = arith.addf %104, %105 : vector<8x128xf32>
    %107 = arith.truncf %97 : vector<8x128xf32> to vector<8x128xbf16>
    %cst_45 = arith.constant dense<0.000000e+00> : vector<8x128xf32>
    %108 = tpu.matmul %107, %99, %cst_45 {dimension_numbers = #tpu.dot_dimension_numbers<[1], [0], [0], [1], [0, 0, 1, 1], [], []>} : vector<8x128xbf16>, vector<128x128xbf16>, vector<8x128xf32> -> vector<8x128xf32>
    %109 = vector.broadcast %102 : vector<1x128xf32> to vector<8x128xf32>
    %110 = arith.addf %108, %109 : vector<8x128xf32>
    %cst_46 = arith.constant 2.000000e-01 : f32
    %111 = vector.broadcast %cst_46 : f32 to vector<8x128xf32>
    %112 = arith.mulf %111, %106 : vector<8x128xf32>
    %113 = arith.maximumf %106, %112 : vector<8x128xf32>
    %cst_47 = arith.constant 2.000000e-01 : f32
    %114 = vector.broadcast %cst_47 : f32 to vector<8x128xf32>
    %115 = arith.mulf %114, %110 : vector<8x128xf32>
    %116 = arith.maximumf %110, %115 : vector<8x128xf32>
    %c5 = arith.constant 5 : index
    %c0_48 = arith.constant 0 : index
    %c0_49 = arith.constant 0 : index
    %117 = vector.load %arg2[%c5, %c0_48, %c0_49] : memref<8x128x128xbf16, #tpu.memory_space<vmem>>, vector<1x128x128xbf16>
    %118 = vector.shape_cast %117 : vector<1x128x128xbf16> to vector<128x128xbf16>
    %c5_50 = arith.constant 5 : index
    %c0_51 = arith.constant 0 : index
    %119 = vector.load %arg3[%c5_50, %c0_51] : memref<8x128xf32, #tpu.memory_space<vmem>>, vector<1x128xf32>
    %120 = vector.shape_cast %119 : vector<1x128xf32> to vector<128xf32>
    %121 = vector.shape_cast %120 : vector<128xf32> to vector<1x128xf32>
    %122 = arith.truncf %113 : vector<8x128xf32> to vector<8x128xbf16>
    %cst_52 = arith.constant dense<0.000000e+00> : vector<8x128xf32>
    %123 = tpu.matmul %122, %118, %cst_52 {dimension_numbers = #tpu.dot_dimension_numbers<[1], [0], [0], [1], [0, 0, 1, 1], [], []>} : vector<8x128xbf16>, vector<128x128xbf16>, vector<8x128xf32> -> vector<8x128xf32>
    %124 = vector.broadcast %121 : vector<1x128xf32> to vector<8x128xf32>
    %125 = arith.addf %123, %124 : vector<8x128xf32>
    %126 = arith.truncf %116 : vector<8x128xf32> to vector<8x128xbf16>
    %cst_53 = arith.constant dense<0.000000e+00> : vector<8x128xf32>
    %127 = tpu.matmul %126, %118, %cst_53 {dimension_numbers = #tpu.dot_dimension_numbers<[1], [0], [0], [1], [0, 0, 1, 1], [], []>} : vector<8x128xbf16>, vector<128x128xbf16>, vector<8x128xf32> -> vector<8x128xf32>
    %128 = vector.broadcast %121 : vector<1x128xf32> to vector<8x128xf32>
    %129 = arith.addf %127, %128 : vector<8x128xf32>
    %cst_54 = arith.constant 2.000000e-01 : f32
    %130 = vector.broadcast %cst_54 : f32 to vector<8x128xf32>
    %131 = arith.mulf %130, %125 : vector<8x128xf32>
    %132 = arith.maximumf %125, %131 : vector<8x128xf32>
    %cst_55 = arith.constant 2.000000e-01 : f32
    %133 = vector.broadcast %cst_55 : f32 to vector<8x128xf32>
    %134 = arith.mulf %133, %129 : vector<8x128xf32>
    %135 = arith.maximumf %129, %134 : vector<8x128xf32>
    %c6 = arith.constant 6 : index
    %c0_56 = arith.constant 0 : index
    %c0_57 = arith.constant 0 : index
    %136 = vector.load %arg2[%c6, %c0_56, %c0_57] : memref<8x128x128xbf16, #tpu.memory_space<vmem>>, vector<1x128x128xbf16>
    %137 = vector.shape_cast %136 : vector<1x128x128xbf16> to vector<128x128xbf16>
    %c6_58 = arith.constant 6 : index
    %c0_59 = arith.constant 0 : index
    %138 = vector.load %arg3[%c6_58, %c0_59] : memref<8x128xf32, #tpu.memory_space<vmem>>, vector<1x128xf32>
    %139 = vector.shape_cast %138 : vector<1x128xf32> to vector<128xf32>
    %140 = vector.shape_cast %139 : vector<128xf32> to vector<1x128xf32>
    %141 = arith.truncf %132 : vector<8x128xf32> to vector<8x128xbf16>
    %cst_60 = arith.constant dense<0.000000e+00> : vector<8x128xf32>
    %142 = tpu.matmul %141, %137, %cst_60 {dimension_numbers = #tpu.dot_dimension_numbers<[1], [0], [0], [1], [0, 0, 1, 1], [], []>} : vector<8x128xbf16>, vector<128x128xbf16>, vector<8x128xf32> -> vector<8x128xf32>
    %143 = vector.broadcast %140 : vector<1x128xf32> to vector<8x128xf32>
    %144 = arith.addf %142, %143 : vector<8x128xf32>
    %145 = arith.truncf %135 : vector<8x128xf32> to vector<8x128xbf16>
    %cst_61 = arith.constant dense<0.000000e+00> : vector<8x128xf32>
    %146 = tpu.matmul %145, %137, %cst_61 {dimension_numbers = #tpu.dot_dimension_numbers<[1], [0], [0], [1], [0, 0, 1, 1], [], []>} : vector<8x128xbf16>, vector<128x128xbf16>, vector<8x128xf32> -> vector<8x128xf32>
    %147 = vector.broadcast %140 : vector<1x128xf32> to vector<8x128xf32>
    %148 = arith.addf %146, %147 : vector<8x128xf32>
    %cst_62 = arith.constant 2.000000e-01 : f32
    %149 = vector.broadcast %cst_62 : f32 to vector<8x128xf32>
    %150 = arith.mulf %149, %144 : vector<8x128xf32>
    %151 = arith.maximumf %144, %150 : vector<8x128xf32>
    %cst_63 = arith.constant 2.000000e-01 : f32
    %152 = vector.broadcast %cst_63 : f32 to vector<8x128xf32>
    %153 = arith.mulf %152, %148 : vector<8x128xf32>
    %154 = arith.maximumf %148, %153 : vector<8x128xf32>
    %c7 = arith.constant 7 : index
    %c0_64 = arith.constant 0 : index
    %c0_65 = arith.constant 0 : index
    %155 = vector.load %arg2[%c7, %c0_64, %c0_65] : memref<8x128x128xbf16, #tpu.memory_space<vmem>>, vector<1x128x128xbf16>
    %156 = vector.shape_cast %155 : vector<1x128x128xbf16> to vector<128x128xbf16>
    %c7_66 = arith.constant 7 : index
    %c0_67 = arith.constant 0 : index
    %157 = vector.load %arg3[%c7_66, %c0_67] : memref<8x128xf32, #tpu.memory_space<vmem>>, vector<1x128xf32>
    %158 = vector.shape_cast %157 : vector<1x128xf32> to vector<128xf32>
    %159 = vector.shape_cast %158 : vector<128xf32> to vector<1x128xf32>
    %160 = arith.truncf %151 : vector<8x128xf32> to vector<8x128xbf16>
    %cst_68 = arith.constant dense<0.000000e+00> : vector<8x128xf32>
    %161 = tpu.matmul %160, %156, %cst_68 {dimension_numbers = #tpu.dot_dimension_numbers<[1], [0], [0], [1], [0, 0, 1, 1], [], []>} : vector<8x128xbf16>, vector<128x128xbf16>, vector<8x128xf32> -> vector<8x128xf32>
    %162 = vector.broadcast %159 : vector<1x128xf32> to vector<8x128xf32>
    %163 = arith.addf %161, %162 : vector<8x128xf32>
    %164 = arith.truncf %154 : vector<8x128xf32> to vector<8x128xbf16>
    %cst_69 = arith.constant dense<0.000000e+00> : vector<8x128xf32>
    %165 = tpu.matmul %164, %156, %cst_69 {dimension_numbers = #tpu.dot_dimension_numbers<[1], [0], [0], [1], [0, 0, 1, 1], [], []>} : vector<8x128xbf16>, vector<128x128xbf16>, vector<8x128xf32> -> vector<8x128xf32>
    %166 = vector.broadcast %159 : vector<1x128xf32> to vector<8x128xf32>
    %167 = arith.addf %165, %166 : vector<8x128xf32>
    %cst_70 = arith.constant 2.000000e-01 : f32
    %168 = vector.broadcast %cst_70 : f32 to vector<8x128xf32>
    %169 = arith.mulf %168, %163 : vector<8x128xf32>
    %170 = arith.maximumf %163, %169 : vector<8x128xf32>
    %cst_71 = arith.constant 2.000000e-01 : f32
    %171 = vector.broadcast %cst_71 : f32 to vector<8x128xf32>
    %172 = arith.mulf %171, %167 : vector<8x128xf32>
    %173 = arith.maximumf %167, %172 : vector<8x128xf32>
    %c0_72 = arith.constant 0 : index
    %c0_73 = arith.constant 0 : index
    %174 = vector.load %arg4[%c0_72, %c0_73] : memref<16x128xf32, #tpu.memory_space<vmem>>, vector<8x128xf32>
    tpu.vector_store %arg4[%c0_72, %c0_73], %170 {strides = array<i32>} : memref<16x128xf32, #tpu.memory_space<vmem>>, vector<8x128xf32>,
    %c8_74 = arith.constant 8 : index
    %c0_75 = arith.constant 0 : index
    %175 = vector.load %arg4[%c8_74, %c0_75] : memref<16x128xf32, #tpu.memory_space<vmem>>, vector<8x128xf32>
    tpu.vector_store %arg4[%c8_74, %c0_75], %173 {strides = array<i32>} : memref<16x128xf32, #tpu.memory_space<vmem>>, vector<8x128xf32>,
    return
  }
  func.func @transform_0(%arg0: i32) -> (i32, i32) {
    %c0_i32 = arith.constant 0 : i32
    %c0_i32_0 = arith.constant 0 : i32
    return %arg0, %c0_i32 : i32, i32
  }
  func.func @transform_1(%arg0: i32) -> (i32, i32, i32) {
    %c0_i32 = arith.constant 0 : i32
    %c0_i32_0 = arith.constant 0 : i32
    %c0_i32_1 = arith.constant 0 : i32
    %c0_i32_2 = arith.constant 0 : i32
    return %c0_i32, %c0_i32_0, %c0_i32_1 : i32, i32, i32
  }
  func.func @transform_2(%arg0: i32) -> (i32, i32) {
    %c0_i32 = arith.constant 0 : i32
    %c0_i32_0 = arith.constant 0 : i32
    %c0_i32_1 = arith.constant 0 : i32
    return %c0_i32, %c0_i32_0 : i32, i32
  }
  func.func @transform_3(%arg0: i32) -> (i32, i32) {
    %c0_i32 = arith.constant 0 : i32
    %c0_i32_0 = arith.constant 0 : i32
    return %arg0, %c0_i32 : i32, i32
  }
}

</mosaic_0001>

<llo_original>
// kernel: tpu_custom_call.1
$region0: #{tpu_custom_call.1}
  #allocation0 [shape = 'u32[]', space=smem, size = 0x4, offset = 0x4, fixed_abs, tag = 'smem constant byte address 0x4 - core index']
  #allocation1 [shape = 'u32[144,128]{1,0:T(1,128)}', space=vmem, size = 0x12000, scoped, tag = 'internal scratch']
  %s0 = inlined_call_operand.hbm [shape: f32[16,128], index: 0, kind: input, shape index: {}]
  %s1 = inlined_call_operand.hbm [shape: bf16[8,128,128], index: 1, kind: input, shape index: {}]
  %s2 = inlined_call_operand.hbm [shape: f32[8,128], index: 2, kind: input, shape index: {}]
  %s3 = inlined_call_operand.hbm [shape: f32[16,128], index: 3, kind: output, shape index: {}]
  %s4 = sld [smem:[#allocation0]]
  $region34: #{tpu_custom_call.1} parent=0
    _
  %s6 = ssub.s32 1, %s4
  %s7 = scalar_select 0, %s6, %s4
  $region1: #{tpu_custom_call.1} parent=0
    #allocation2 [shape = 'u8[8192]{0}', space=vmem, size = 0x2000, scoped, tag = 'input window, operand 0, single buffered']
    #allocation3 [shape = 's32[1]{0}', space=sflag, size = 0x4, scoped, tag = 'scoped memory for tpu_custom_call.1']
    #allocation4 [shape = 's32[1]{0}', space=sflag, size = 0x4, scoped, tag = 'scoped memory for tpu_custom_call.1']
    #allocation5 [shape = 'u8[262144]{0}', space=vmem, size = 0x40000, scoped, tag = 'input window, operand 1, single buffered']
    #allocation6 [shape = 's32[1]{0}', space=sflag, size = 0x4, scoped, tag = 'scoped memory for tpu_custom_call.1']
    #allocation7 [shape = 'u8[4096]{0}', space=vmem, size = 0x1000, scoped, tag = 'input window, operand 2, single buffered']
    #allocation8 [shape = 'u8[8192]{0}', space=vmem, size = 0x2000, scoped, tag = 'output window, operand 0, single buffered']
    %8 = vsyncpa [#allocation3], 0
    %9 = vsyncpa [#allocation6], 0
    %10 = vsyncpa [#allocation4], 0
    // Predicated region
    $region2: #{tpu_custom_call.1} parent=1 // pred_check
      _
    $region3: #{tpu_custom_call.1} parent=1 // pred_check_branch
      %12 = sbr.rel (0) target = $region5
    $region4: #{tpu_custom_call.1} parent=1 // pred_region
      %s14 = ssub.s32 256, 256
      %15 = vsyncadd [#allocation3], %s14
      %s16 = sshll.u32 [#allocation2], 4
      %s17 = int_to_ptr.vmem [resolvable:$true] %s16
      %22 = dma.hbm_to_vmem [thread:$0]  %s0, 256, %s17, [#allocation3], 128, 128, 8
    $region5: #{tpu_custom_call.1} parent=1 // pred_fallthru
      _
    // Predicated region
    $region6: #{tpu_custom_call.1} parent=1 // pred_check
      _
    $region7: #{tpu_custom_call.1} parent=1 // pred_check_branch
      %24 = sbr.rel (0) target = $region9
    $region8: #{tpu_custom_call.1} parent=1 // pred_region
      %s26 = ssub.s32 8192, 8192
      %27 = vsyncadd [#allocation6], %s26
      %s28 = sshll.u32 [#allocation5], 4
      %s29 = int_to_ptr.vmem [resolvable:$true] %s28
      %34 = dma.hbm_to_vmem [thread:$0]  %s1, 8192, %s29, [#allocation6], 64, 64, 4
    $region9: #{tpu_custom_call.1} parent=1 // pred_fallthru
      _
    // Predicated region
    $region10: #{tpu_custom_call.1} parent=1 // pred_check
      _
    $region11: #{tpu_custom_call.1} parent=1 // pred_check_branch
      %36 = sbr.rel (0) target = $region13
    $region12: #{tpu_custom_call.1} parent=1 // pred_region
      %s38 = ssub.s32 128, 128
      %39 = vsyncadd [#allocation6], %s38
      %s41 = sshll.u32 [#allocation7], 4
      %s42 = int_to_ptr.vmem [resolvable:$true] %s41
      %44 = dma.hbm_to_vmem [thread:$0]  %s2, 128, %s42, [#allocation6]
    $region13: #{tpu_custom_call.1} parent=1 // pred_fallthru
      _
    // Predicated region
    $region14: #{tpu_custom_call.1} parent=1 // pred_check
      _
    $region15: #{tpu_custom_call.1} parent=1 // pred_check_branch
      %46 = sbr.rel (0) target = $region17
    $region16: #{tpu_custom_call.1} parent=1 // pred_region
      %47 = dma.done [#allocation3], 256
    $region17: #{tpu_custom_call.1} parent=1 // pred_fallthru
      _
    // Predicated region
    $region18: #{tpu_custom_call.1} parent=1 // pred_check
      _
    $region19: #{tpu_custom_call.1} parent=1 // pred_check_branch
      %49 = sbr.rel (0) target = $region21
    $region20: #{tpu_custom_call.1} parent=1 // pred_region
      %50 = dma.done [#allocation6], 8192
    $region21: #{tpu_custom_call.1} parent=1 // pred_fallthru
      _
    // Predicated region
    $region22: #{tpu_custom_call.1} parent=1 // pred_check
      _
    $region23: #{tpu_custom_call.1} parent=1 // pred_check_branch
      %52 = sbr.rel (0) target = $region25
    $region24: #{tpu_custom_call.1} parent=1 // pred_region
      %53 = dma.done [#allocation6], 128
    $region25: #{tpu_custom_call.1} parent=1 // pred_fallthru
      _
    %v55 = vld [vmem:[#allocation2] sm:$0xff]
    %v56 = vmul.f32 %v55, %v55
    %57 = vadd.xlane.f32.xlu0 %v56
    %v58 = vpop.xlane.xlu0 %57
    %v59 = vrcp.pop 128.0
    %v60 = vmul.f32 %v58, %v59
    %v61 = vadd.f32 %v60, 1e-08
    %v62 = vrsqrt.pop %v61
    %v63 = vmul.f32 %v55, %v62
    %v64 = vld [vmem:[#allocation2 + $0x8] sm:$0xff]
    %v65 = vmul.f32 %v64, %v64
    %66 = vadd.xlane.f32.xlu0 %v65
    %v67 = vpop.xlane.xlu0 %66
    %v68 = vmul.f32 %v67, %v59
    %v69 = vadd.f32 %v68, 1e-08
    %v70 = vrsqrt.pop %v69
    %v71 = vmul.f32 %v64, %v70
    %v72 = vld [vmem:[#allocation5] sm:$0xf]
    %v73 = vld [vmem:[#allocation5 + $0x4] sm:$0xf]
    %v74 = vld [vmem:[#allocation5 + $0x8] sm:$0xf]
    %v75 = vld [vmem:[#allocation5 + $0xc] sm:$0xf]
    %v76 = vld [vmem:[#allocation5 + $0x10] sm:$0xf]
    %v77 = vld [vmem:[#allocation5 + $0x14] sm:$0xf]
    %v78 = vld [vmem:[#allocation5 + $0x18] sm:$0xf]
    %v79 = vld [vmem:[#allocation5 + $0x1c] sm:$0xf]
    %v80 = vld [vmem:[#allocation5 + $0x20] sm:$0xf]
    %v81 = vld [vmem:[#allocation5 + $0x24] sm:$0xf]
    %v82 = vld [vmem:[#allocation5 + $0x28] sm:$0xf]
    %v83 = vld [vmem:[#allocation5 + $0x2c] sm:$0xf]
    %v84 = vld [vmem:[#allocation5 + $0x30] sm:$0xf]
    %v85 = vld [vmem:[#allocation5 + $0x34] sm:$0xf]
    %v86 = vld [vmem:[#allocation5 + $0x38] sm:$0xf]
    %v87 = vld [vmem:[#allocation5 + $0x3c] sm:$0xf]
    %v88 = vld [vmem:[#allocation7] sm:$0x1]
    %v89 = vpack.c.bf16 %v63, %v63
    %v90 = vlaneseq
    %v91 = vshrl.u32 %v90, 7
    %v92 = vsub.s32 0, %v91
    %v93 = vrot.slane %v88, %v92
    %v110 = vunpack.c.l.b16 %v72
    %v111 = vunpack.c.l.b16 %v73
    %v112 = vunpack.c.l.b16 %v74
    %v113 = vunpack.c.l.b16 %v75
    %v114 = vunpack.c.l.b16 %v76
    %v115 = vunpack.c.l.b16 %v77
    %v116 = vunpack.c.l.b16 %v78
    %v117 = vunpack.c.l.b16 %v79
    %v118 = vunpack.c.l.b16 %v80
    %v119 = vunpack.c.l.b16 %v81
    %v120 = vunpack.c.l.b16 %v82
    %v121 = vunpack.c.l.b16 %v83
    %v122 = vunpack.c.l.b16 %v84
    %v123 = vunpack.c.l.b16 %v85
    %v124 = vunpack.c.l.b16 %v86
    %v125 = vunpack.c.l.b16 %v87
    %v126 = vpack.c.b16 %v111, %v110
    %v127 = vpack.c.b16 %v113, %v112
    %v128 = vpack.c.b16 %v115, %v114
    %v129 = vpack.c.b16 %v117, %v116
    %v130 = vpack.c.b16 %v119, %v118
    %v131 = vpack.c.b16 %v121, %v120
    %v132 = vpack.c.b16 %v123, %v122
    %v133 = vpack.c.b16 %v125, %v124
    %142 = vmatprep.subr.bf16.mxu0 0
    %143 = vmatpush1.bf16.msra.mxu0 %v126
    %144 = vmatprep.subr.bf16.mxu0 0
    %145 = vmatpush1.bf16.msra.mxu0 %v127
    %146 = vmatprep.subr.bf16.mxu0 0
    %147 = vmatpush1.bf16.msra.mxu0 %v128
    %148 = vmatprep.subr.bf16.mxu0 0
    %149 = vmatpush1.bf16.msra.mxu0 %v129
    %150 = vmatprep.subr.bf16.mxu0 0
    %151 = vmatpush1.bf16.msra.mxu0 %v130
    %152 = vmatprep.subr.bf16.mxu0 0
    %153 = vmatpush1.bf16.msra.mxu0 %v131
    %154 = vmatprep.subr.bf16.mxu0 0
    %155 = vmatpush1.bf16.msra.mxu0 %v132
    %156 = vmatprep.subr.bf16.mxu0 0
    %157 = vmatpush1.bf16.msra.mxu0 %v133
    %158 = vmatprep.subr.bf16.mxu0 0
    %159 = vmatpush1.bf16.msra.mxu0 0
    %160 = vmatprep.subr.bf16.mxu0 0
    %161 = vmatpush1.bf16.msra.mxu0 0
    %162 = vmatprep.subr.bf16.mxu0 0
    %163 = vmatpush1.bf16.msra.mxu0 0
    %164 = vmatprep.subr.bf16.mxu0 0
    %165 = vmatpush1.bf16.msra.mxu0 0
    %166 = vmatprep.subr.bf16.mxu0 0
    %167 = vmatpush1.bf16.msra.mxu0 0
    %168 = vmatprep.subr.bf16.mxu0 0
    %169 = vmatpush1.bf16.msra.mxu0 0
    %170 = vmatprep.subr.bf16.mxu0 0
    %171 = vmatpush1.bf16.msra.mxu0 0
    %172 = vmatprep.subr.bf16.mxu0 0
    %173 = vmatpush1.bf16.msra.mxu0 0
    %174 = vmatprep.mubr.bf16.mxu0 0
    %175 = vmatmul.mubr.bf16.gmra.mrb[0].mxu0 %v89
    %v176 = vpop.f32.mrb[0].mxu0
    %v177 = vadd.f32 %v93, %v176
    %v178 = vpop.f32.mrb[0].mxu0
    %v179 = vpop.f32.mrb[0].mxu0
    %v180 = vpop.f32.mrb[0].mxu0
    %181 = vdwg.mxu0
    %v182 = vpack.c.bf16 %v71, %v71
    %183 = vmatprep.subr.bf16.mxu0 0
    %184 = vmatpush1.bf16.msra.mxu0 %v126
    %185 = vmatprep.subr.bf16.mxu0 0
    %186 = vmatpush1.bf16.msra.mxu0 %v127
    %187 = vmatprep.subr.bf16.mxu0 0
    %188 = vmatpush1.bf16.msra.mxu0 %v128
    %189 = vmatprep.subr.bf16.mxu0 0
    %190 = vmatpush1.bf16.msra.mxu0 %v129
    %191 = vmatprep.subr.bf16.mxu0 0
    %192 = vmatpush1.bf16.msra.mxu0 %v130
    %193 = vmatprep.subr.bf16.mxu0 0
    %194 = vmatpush1.bf16.msra.mxu0 %v131
    %195 = vmatprep.subr.bf16.mxu0 0
    %196 = vmatpush1.bf16.msra.mxu0 %v132
    %197 = vmatprep.subr.bf16.mxu0 0
    %198 = vmatpush1.bf16.msra.mxu0 %v133
    %199 = vmatprep.subr.bf16.mxu0 0
    %200 = vmatpush1.bf16.msra.mxu0 0
    %201 = vmatprep.subr.bf16.mxu0 0
    %202 = vmatpush1.bf16.msra.mxu0 0
    %203 = vmatprep.subr.bf16.mxu0 0
    %204 = vmatpush1.bf16.msra.mxu0 0
    %205 = vmatprep.subr.bf16.mxu0 0
    %206 = vmatpush1.bf16.msra.mxu0 0
    %207 = vmatprep.subr.bf16.mxu0 0
    %208 = vmatpush1.bf16.msra.mxu0 0
    %209 = vmatprep.subr.bf16.mxu0 0
    %210 = vmatpush1.bf16.msra.mxu0 0
    %211 = vmatprep.subr.bf16.mxu0 0
    %212 = vmatpush1.bf16.msra.mxu0 0
    %213 = vmatprep.subr.bf16.mxu0 0
    %214 = vmatpush1.bf16.msra.mxu0 0
    %215 = vmatprep.mubr.bf16.mxu0 0
    %216 = vmatmul.mubr.bf16.gmra.mrb[0].mxu0 %v182
    %v217 = vpop.f32.mrb[0].mxu0
    %v218 = vadd.f32 %v93, %v217
    %v219 = vpop.f32.mrb[0].mxu0
    %v220 = vpop.f32.mrb[0].mxu0
    %v221 = vpop.f32.mrb[0].mxu0
    %222 = vdwg.mxu0
    %v223 = vmul.f32 %v177, 0.2
    %v224 = vmax.f32 %v177, %v223
    %v225 = vmul.f32 %v218, 0.2
    %v226 = vmax.f32 %v218, %v225
    %s227 = scalar_lea.vmem [#allocation5], 64
    %v228 = vld [vmem:[%s227] sm:$0xf]
    %v229 = vld [vmem:[%s227 + $0x4] sm:$0xf]
    %v230 = vld [vmem:[%s227 + $0x8] sm:$0xf]
    %v231 = vld [vmem:[%s227 + $0xc] sm:$0xf]
    %v232 = vld [vmem:[%s227 + $0x10] sm:$0xf]
    %v233 = vld [vmem:[%s227 + $0x14] sm:$0xf]
    %v234 = vld [vmem:[%s227 + $0x18] sm:$0xf]
    %v235 = vld [vmem:[%s227 + $0x1c] sm:$0xf]
    %v236 = vld [vmem:[%s227 + $0x20] sm:$0xf]
    %v237 = vld [vmem:[%s227 + $0x24] sm:$0xf]
    %v238 = vld [vmem:[%s227 + $0x28] sm:$0xf]
    %v239 = vld [vmem:[%s227 + $0x2c] sm:$0xf]
    %v240 = vld [vmem:[%s227 + $0x30] sm:$0xf]
    %v241 = vld [vmem:[%s227 + $0x34] sm:$0xf]
    %v242 = vld [vmem:[%s227 + $0x38] sm:$0xf]
    %v243 = vld [vmem:[%s227 + $0x3c] sm:$0xf]
    %v244 = vld [vmem:[#allocation7 + $0x1] sm:$0x1]
    %v245 = vpack.c.bf16 %v224, %v224
    %v246 = vlaneseq
    %v247 = vshrl.u32 %v246, 7
    %v248 = vsub.s32 0, %v247
    %v249 = vrot.slane %v244, %v248
    %v266 = vunpack.c.l.b16 %v228
    %v267 = vunpack.c.l.b16 %v229
    %v268 = vunpack.c.l.b16 %v230
    %v269 = vunpack.c.l.b16 %v231
    %v270 = vunpack.c.l.b16 %v232
    %v271 = vunpack.c.l.b16 %v233
    %v272 = vunpack.c.l.b16 %v234
    %v273 = vunpack.c.l.b16 %v235
    %v274 = vunpack.c.l.b16 %v236
    %v275 = vunpack.c.l.b16 %v237
    %v276 = vunpack.c.l.b16 %v238
    %v277 = vunpack.c.l.b16 %v239
    %v278 = vunpack.c.l.b16 %v240
    %v279 = vunpack.c.l.b16 %v241
    %v280 = vunpack.c.l.b16 %v242
    %v281 = vunpack.c.l.b16 %v243
    %v282 = vpack.c.b16 %v267, %v266
    %v283 = vpack.c.b16 %v269, %v268
    %v284 = vpack.c.b16 %v271, %v270
    %v285 = vpack.c.b16 %v273, %v272
    %v286 = vpack.c.b16 %v275, %v274
    %v287 = vpack.c.b16 %v277, %v276
    %v288 = vpack.c.b16 %v279, %v278
    %v289 = vpack.c.b16 %v281, %v280
    %298 = vmatprep.subr.bf16.mxu0 0
    %299 = vmatpush1.bf16.msra.mxu0 %v282
    %300 = vmatprep.subr.bf16.mxu0 0
    %301 = vmatpush1.bf16.msra.mxu0 %v283
    %302 = vmatprep.subr.bf16.mxu0 0
    %303 = vmatpush1.bf16.msra.mxu0 %v284
    %304 = vmatprep.subr.bf16.mxu0 0
    %305 = vmatpush1.bf16.msra.mxu0 %v285
    %306 = vmatprep.subr.bf16.mxu0 0
    %307 = vmatpush1.bf16.msra.mxu0 %v286
    %308 = vmatprep.subr.bf16.mxu0 0
    %309 = vmatpush1.bf16.msra.mxu0 %v287
    %310 = vmatprep.subr.bf16.mxu0 0
    %311 = vmatpush1.bf16.msra.mxu0 %v288
    %312 = vmatprep.subr.bf16.mxu0 0
    %313 = vmatpush1.bf16.msra.mxu0 %v289
    %314 = vmatprep.subr.bf16.mxu0 0
    %315 = vmatpush1.bf16.msra.mxu0 0
    %316 = vmatprep.subr.bf16.mxu0 0
    %317 = vmatpush1.bf16.msra.mxu0 0
    %318 = vmatprep.subr.bf16.mxu0 0
    %319 = vmatpush1.bf16.msra.mxu0 0
    %320 = vmatprep.subr.bf16.mxu0 0
    %321 = vmatpush1.bf16.msra.mxu0 0
    %322 = vmatprep.subr.bf16.mxu0 0
    %323 = vmatpush1.bf16.msra.mxu0 0
    %324 = vmatprep.subr.bf16.mxu0 0
    %325 = vmatpush1.bf16.msra.mxu0 0
    %326 = vmatprep.subr.bf16.mxu0 0
    %327 = vmatpush1.bf16.msra.mxu0 0
    %328 = vmatprep.subr.bf16.mxu0 0
    %329 = vmatpush1.bf16.msra.mxu0 0
    %330 = vmatprep.mubr.bf16.mxu0 0
    %331 = vmatmul.mubr.bf16.gmra.mrb[0].mxu0 %v245
    %v332 = vpop.f32.mrb[0].mxu0
    %v333 = vadd.f32 %v249, %v332
    %v334 = vpop.f32.mrb[0].mxu0
    %v335 = vpop.f32.mrb[0].mxu0
    %v336 = vpop.f32.mrb[0].mxu0
    %337 = vdwg.mxu0
    %v338 = vpack.c.bf16 %v226, %v226
    %339 = vmatprep.subr.bf16.mxu0 0
    %340 = vmatpush1.bf16.msra.mxu0 %v282
    %341 = vmatprep.subr.bf16.mxu0 0
    %342 = vmatpush1.bf16.msra.mxu0 %v283
    %343 = vmatprep.subr.bf16.mxu0 0
    %344 = vmatpush1.bf16.msra.mxu0 %v284
    %345 = vmatprep.subr.bf16.mxu0 0
    %346 = vmatpush1.bf16.msra.mxu0 %v285
    %347 = vmatprep.subr.bf16.mxu0 0
    %348 = vmatpush1.bf16.msra.mxu0 %v286
    %349 = vmatprep.subr.bf16.mxu0 0
    %350 = vmatpush1.bf16.msra.mxu0 %v287
    %351 = vmatprep.subr.bf16.mxu0 0
    %352 = vmatpush1.bf16.msra.mxu0 %v288
    %353 = vmatprep.subr.bf16.mxu0 0
    %354 = vmatpush1.bf16.msra.mxu0 %v289
    %355 = vmatprep.subr.bf16.mxu0 0
    %356 = vmatpush1.bf16.msra.mxu0 0
    %357 = vmatprep.subr.bf16.mxu0 0
    %358 = vmatpush1.bf16.msra.mxu0 0
    %359 = vmatprep.subr.bf16.mxu0 0
    %360 = vmatpush1.bf16.msra.mxu0 0
    %361 = vmatprep.subr.bf16.mxu0 0
    %362 = vmatpush1.bf16.msra.mxu0 0
    %363 = vmatprep.subr.bf16.mxu0 0
    %364 = vmatpush1.bf16.msra.mxu0 0
    %365 = vmatprep.subr.bf16.mxu0 0
    %366 = vmatpush1.bf16.msra.mxu0 0
    %367 = vmatprep.subr.bf16.mxu0 0
    %368 = vmatpush1.bf16.msra.mxu0 0
    %369 = vmatprep.subr.bf16.mxu0 0
    %370 = vmatpush1.bf16.msra.mxu0 0
    %371 = vmatprep.mubr.bf16.mxu0 0
    %372 = vmatmul.mubr.bf16.gmra.mrb[0].mxu0 %v338
    %v373 = vpop.f32.mrb[0].mxu0
    %v374 = vadd.f32 %v249, %v373
    %v375 = vpop.f32.mrb[0].mxu0
    %v376 = vpop.f32.mrb[0].mxu0
    %v377 = vpop.f32.mrb[0].mxu0
    %378 = vdwg.mxu0
    %v379 = vmul.f32 %v333, 0.2
    %v380 = vmax.f32 %v333, %v379
    %v381 = vmul.f32 %v374, 0.2
    %v382 = vmax.f32 %v374, %v381
    %s383 = scalar_lea.vmem [#allocation5], 128
    %v384 = vld [vmem:[%s383] sm:$0xf]
    %v385 = vld [vmem:[%s383 + $0x4] sm:$0xf]
    %v386 = vld [vmem:[%s383 + $0x8] sm:$0xf]
    %v387 = vld [vmem:[%s383 + $0xc] sm:$0xf]
    %v388 = vld [vmem:[%s383 + $0x10] sm:$0xf]
    %v389 = vld [vmem:[%s383 + $0x14] sm:$0xf]
    %v390 = vld [vmem:[%s383 + $0x18] sm:$0xf]
    %v391 = vld [vmem:[%s383 + $0x1c] sm:$0xf]
    %v392 = vld [vmem:[%s383 + $0x20] sm:$0xf]
    %v393 = vld [vmem:[%s383 + $0x24] sm:$0xf]
    %v394 = vld [vmem:[%s383 + $0x28] sm:$0xf]
    %v395 = vld [vmem:[%s383 + $0x2c] sm:$0xf]
    %v396 = vld [vmem:[%s383 + $0x30] sm:$0xf]
    %v397 = vld [vmem:[%s383 + $0x34] sm:$0xf]
    %v398 = vld [vmem:[%s383 + $0x38] sm:$0xf]
    %v399 = vld [vmem:[%s383 + $0x3c] sm:$0xf]
    %v400 = vld [vmem:[#allocation7 + $0x2] sm:$0x1]
    %v401 = vpack.c.bf16 %v380, %v380
    %v402 = vlaneseq
    %v403 = vshrl.u32 %v402, 7
    %v404 = vsub.s32 0, %v403
    %v405 = vrot.slane %v400, %v404
    %v422 = vunpack.c.l.b16 %v384
    %v423 = vunpack.c.l.b16 %v385
    %v424 = vunpack.c.l.b16 %v386
    %v425 = vunpack.c.l.b16 %v387
    %v426 = vunpack.c.l.b16 %v388
    %v427 = vunpack.c.l.b16 %v389
    %v428 = vunpack.c.l.b16 %v390
    %v429 = vunpack.c.l.b16 %v391
    %v430 = vunpack.c.l.b16 %v392
    %v431 = vunpack.c.l.b16 %v393
    %v432 = vunpack.c.l.b16 %v394
    %v433 = vunpack.c.l.b16 %v395
    %v434 = vunpack.c.l.b16 %v396
    %v435 = vunpack.c.l.b16 %v397
    %v436 = vunpack.c.l.b16 %v398
    %v437 = vunpack.c.l.b16 %v399
    %v438 = vpack.c.b16 %v423, %v422
    %v439 = vpack.c.b16 %v425, %v424
    %v440 = vpack.c.b16 %v427, %v426
    %v441 = vpack.c.b16 %v429, %v428
    %v442 = vpack.c.b16 %v431, %v430
    %v443 = vpack.c.b16 %v433, %v432
    %v444 = vpack.c.b16 %v435, %v434
    %v445 = vpack.c.b16 %v437, %v436
    %454 = vmatprep.subr.bf16.mxu0 0
    %455 = vmatpush1.bf16.msra.mxu0 %v438
    %456 = vmatprep.subr.bf16.mxu0 0
    %457 = vmatpush1.bf16.msra.mxu0 %v439
    %458 = vmatprep.subr.bf16.mxu0 0
    %459 = vmatpush1.bf16.msra.mxu0 %v440
    %460 = vmatprep.subr.bf16.mxu0 0
    %461 = vmatpush1.bf16.msra.mxu0 %v441
    %462 = vmatprep.subr.bf16.mxu0 0
    %463 = vmatpush1.bf16.msra.mxu0 %v442
    %464 = vmatprep.subr.bf16.mxu0 0
    %465 = vmatpush1.bf16.msra.mxu0 %v443
    %466 = vmatprep.subr.bf16.mxu0 0
    %467 = vmatpush1.bf16.msra.mxu0 %v444
    %468 = vmatprep.subr.bf16.mxu0 0
    %469 = vmatpush1.bf16.msra.mxu0 %v445
    %470 = vmatprep.subr.bf16.mxu0 0
    %471 = vmatpush1.bf16.msra.mxu0 0
    %472 = vmatprep.subr.bf16.mxu0 0
    %473 = vmatpush1.bf16.msra.mxu0 0
    %474 = vmatprep.subr.bf16.mxu0 0
    %475 = vmatpush1.bf16.msra.mxu0 0
    %476 = vmatprep.subr.bf16.mxu0 0
    %477 = vmatpush1.bf16.msra.mxu0 0
    %478 = vmatprep.subr.bf16.mxu0 0
    %479 = vmatpush1.bf16.msra.mxu0 0
    %480 = vmatprep.subr.bf16.mxu0 0
    %481 = vmatpush1.bf16.msra.mxu0 0
    %482 = vmatprep.subr.bf16.mxu0 0
    %483 = vmatpush1.bf16.msra.mxu0 0
    %484 = vmatprep.subr.bf16.mxu0 0
    %485 = vmatpush1.bf16.msra.mxu0 0
    %486 = vmatprep.mubr.bf16.mxu0 0
    %487 = vmatmul.mubr.bf16.gmra.mrb[0].mxu0 %v401
    %v488 = vpop.f32.mrb[0].mxu0
    %v489 = vadd.f32 %v405, %v488
    %v490 = vpop.f32.mrb[0].mxu0
    %v491 = vpop.f32.mrb[0].mxu0
    %v492 = vpop.f32.mrb[0].mxu0
    %493 = vdwg.mxu0
    %v494 = vpack.c.bf16 %v382, %v382
    %495 = vmatprep.subr.bf16.mxu0 0
    %496 = vmatpush1.bf16.msra.mxu0 %v438
    %497 = vmatprep.subr.bf16.mxu0 0
    %498 = vmatpush1.bf16.msra.mxu0 %v439
    %499 = vmatprep.subr.bf16.mxu0 0
    %500 = vmatpush1.bf16.msra.mxu0 %v440
    %501 = vmatprep.subr.bf16.mxu0 0
    %502 = vmatpush1.bf16.msra.mxu0 %v441
    %503 = vmatprep.subr.bf16.mxu0 0
    %504 = vmatpush1.bf16.msra.mxu0 %v442
    %505 = vmatprep.subr.bf16.mxu0 0
    %506 = vmatpush1.bf16.msra.mxu0 %v443
    %507 = vmatprep.subr.bf16.mxu0 0
    %508 = vmatpush1.bf16.msra.mxu0 %v444
    %509 = vmatprep.subr.bf16.mxu0 0
    %510 = vmatpush1.bf16.msra.mxu0 %v445
    %511 = vmatprep.subr.bf16.mxu0 0
    %512 = vmatpush1.bf16.msra.mxu0 0
    %513 = vmatprep.subr.bf16.mxu0 0
    %514 = vmatpush1.bf16.msra.mxu0 0
    %515 = vmatprep.subr.bf16.mxu0 0
    %516 = vmatpush1.bf16.msra.mxu0 0
    %517 = vmatprep.subr.bf16.mxu0 0
    %518 = vmatpush1.bf16.msra.mxu0 0
    %519 = vmatprep.subr.bf16.mxu0 0
    %520 = vmatpush1.bf16.msra.mxu0 0
    %521 = vmatprep.subr.bf16.mxu0 0
    %522 = vmatpush1.bf16.msra.mxu0 0
    %523 = vmatprep.subr.bf16.mxu0 0
    %524 = vmatpush1.bf16.msra.mxu0 0
    %525 = vmatprep.subr.bf16.mxu0 0
    %526 = vmatpush1.bf16.msra.mxu0 0
    %527 = vmatprep.mubr.bf16.mxu0 0
    %528 = vmatmul.mubr.bf16.gmra.mrb[0].mxu0 %v494
    %v529 = vpop.f32.mrb[0].mxu0
    %v530 = vadd.f32 %v405, %v529
    %v531 = vpop.f32.mrb[0].mxu0
    %v532 = vpop.f32.mrb[0].mxu0
    %v533 = vpop.f32.mrb[0].mxu0
    %534 = vdwg.mxu0
    %v535 = vmul.f32 %v489, 0.2
    %v536 = vmax.f32 %v489, %v535
    %v537 = vmul.f32 %v530, 0.2
    %v538 = vmax.f32 %v530, %v537
    %s539 = scalar_lea.vmem [#allocation5], 192
    %v540 = vld [vmem:[%s539] sm:$0xf]
    %v541 = vld [vmem:[%s539 + $0x4] sm:$0xf]
    %v542 = vld [vmem:[%s539 + $0x8] sm:$0xf]
    %v543 = vld [vmem:[%s539 + $0xc] sm:$0xf]
    %v544 = vld [vmem:[%s539 + $0x10] sm:$0xf]
    %v545 = vld [vmem:[%s539 + $0x14] sm:$0xf]
    %v546 = vld [vmem:[%s539 + $0x18] sm:$0xf]
    %v547 = vld [vmem:[%s539 + $0x1c] sm:$0xf]
    %v548 = vld [vmem:[%s539 + $0x20] sm:$0xf]
    %v549 = vld [vmem:[%s539 + $0x24] sm:$0xf]
    %v550 = vld [vmem:[%s539 + $0x28] sm:$0xf]
    %v551 = vld [vmem:[%s539 + $0x2c] sm:$0xf]
    %v552 = vld [vmem:[%s539 + $0x30] sm:$0xf]
    %v553 = vld [vmem:[%s539 + $0x34] sm:$0xf]
    %v554 = vld [vmem:[%s539 + $0x38] sm:$0xf]
    %v555 = vld [vmem:[%s539 + $0x3c] sm:$0xf]
    %v556 = vld [vmem:[#allocation7 + $0x3] sm:$0x1]
    %v557 = vpack.c.bf16 %v536, %v536
    %v558 = vlaneseq
    %v559 = vshrl.u32 %v558, 7
    %v560 = vsub.s32 0, %v559
    %v561 = vrot.slane %v556, %v560
    %v578 = vunpack.c.l.b16 %v540
    %v579 = vunpack.c.l.b16 %v541
    %v580 = vunpack.c.l.b16 %v542
    %v581 = vunpack.c.l.b16 %v543
    %v582 = vunpack.c.l.b16 %v544
    %v583 = vunpack.c.l.b16 %v545
    %v584 = vunpack.c.l.b16 %v546
    %v585 = vunpack.c.l.b16 %v547
    %v586 = vunpack.c.l.b16 %v548
    %v587 = vunpack.c.l.b16 %v549
    %v588 = vunpack.c.l.b16 %v550
    %v589 = vunpack.c.l.b16 %v551
    %v590 = vunpack.c.l.b16 %v552
    %v591 = vunpack.c.l.b16 %v553
    %v592 = vunpack.c.l.b16 %v554
    %v593 = vunpack.c.l.b16 %v555
    %v594 = vpack.c.b16 %v579, %v578
    %v595 = vpack.c.b16 %v581, %v580
    %v596 = vpack.c.b16 %v583, %v582
    %v597 = vpack.c.b16 %v585, %v584
    %v598 = vpack.c.b16 %v587, %v586
    %v599 = vpack.c.b16 %v589, %v588
    %v600 = vpack.c.b16 %v591, %v590
    %v601 = vpack.c.b16 %v593, %v592
    %610 = vmatprep.subr.bf16.mxu0 0
    %611 = vmatpush1.bf16.msra.mxu0 %v594
    %612 = vmatprep.subr.bf16.mxu0 0
    %613 = vmatpush1.bf16.msra.mxu0 %v595
    %614 = vmatprep.subr.bf16.mxu0 0
    %615 = vmatpush1.bf16.msra.mxu0 %v596
    %616 = vmatprep.subr.bf16.mxu0 0
    %617 = vmatpush1.bf16.msra.mxu0 %v597
    %618 = vmatprep.subr.bf16.mxu0 0
    %619 = vmatpush1.bf16.msra.mxu0 %v598
    %620 = vmatprep.subr.bf16.mxu0 0
    %621 = vmatpush1.bf16.msra.mxu0 %v599
    %622 = vmatprep.subr.bf16.mxu0 0
    %623 = vmatpush1.bf16.msra.mxu0 %v600
    %624 = vmatprep.subr.bf16.mxu0 0
    %625 = vmatpush1.bf16.msra.mxu0 %v601
    %626 = vmatprep.subr.bf16.mxu0 0
    %627 = vmatpush1.bf16.msra.mxu0 0
    %628 = vmatprep.subr.bf16.mxu0 0
    %629 = vmatpush1.bf16.msra.mxu0 0
    %630 = vmatprep.subr.bf16.mxu0 0
    %631 = vmatpush1.bf16.msra.mxu0 0
    %632 = vmatprep.subr.bf16.mxu0 0
    %633 = vmatpush1.bf16.msra.mxu0 0
    %634 = vmatprep.subr.bf16.mxu0 0
    %635 = vmatpush1.bf16.msra.mxu0 0
    %636 = vmatprep.subr.bf16.mxu0 0
    %637 = vmatpush1.bf16.msra.mxu0 0
    %638 = vmatprep.subr.bf16.mxu0 0
    %639 = vmatpush1.bf16.msra.mxu0 0
    %640 = vmatprep.subr.bf16.mxu0 0
    %641 = vmatpush1.bf16.msra.mxu0 0
    %642 = vmatprep.mubr.bf16.mxu0 0
    %643 = vmatmul.mubr.bf16.gmra.mrb[0].mxu0 %v557
    %v644 = vpop.f32.mrb[0].mxu0
    %v645 = vadd.f32 %v561, %v644
    %v646 = vpop.f32.mrb[0].mxu0
    %v647 = vpop.f32.mrb[0].mxu0
    %v648 = vpop.f32.mrb[0].mxu0
    %649 = vdwg.mxu0
    %v650 = vpack.c.bf16 %v538, %v538
    %651 = vmatprep.subr.bf16.mxu0 0
    %652 = vmatpush1.bf16.msra.mxu0 %v594
    %653 = vmatprep.subr.bf16.mxu0 0
    %654 = vmatpush1.bf16.msra.mxu0 %v595
    %655 = vmatprep.subr.bf16.mxu0 0
    %656 = vmatpush1.bf16.msra.mxu0 %v596
    %657 = vmatprep.subr.bf16.mxu0 0
    %658 = vmatpush1.bf16.msra.mxu0 %v597
    %659 = vmatprep.subr.bf16.mxu0 0
    %660 = vmatpush1.bf16.msra.mxu0 %v598
    %661 = vmatprep.subr.bf16.mxu0 0
    %662 = vmatpush1.bf16.msra.mxu0 %v599
    %663 = vmatprep.subr.bf16.mxu0 0
    %664 = vmatpush1.bf16.msra.mxu0 %v600
    %665 = vmatprep.subr.bf16.mxu0 0
    %666 = vmatpush1.bf16.msra.mxu0 %v601
    %667 = vmatprep.subr.bf16.mxu0 0
    %668 = vmatpush1.bf16.msra.mxu0 0
    %669 = vmatprep.subr.bf16.mxu0 0
    %670 = vmatpush1.bf16.msra.mxu0 0
    %671 = vmatprep.subr.bf16.mxu0 0
    %672 = vmatpush1.bf16.msra.mxu0 0
    %673 = vmatprep.subr.bf16.mxu0 0
    %674 = vmatpush1.bf16.msra.mxu0 0
    %675 = vmatprep.subr.bf16.mxu0 0
    %676 = vmatpush1.bf16.msra.mxu0 0
    %677 = vmatprep.subr.bf16.mxu0 0
    %678 = vmatpush1.bf16.msra.mxu0 0
    %679 = vmatprep.subr.bf16.mxu0 0
    %680 = vmatpush1.bf16.msra.mxu0 0
    %681 = vmatprep.subr.bf16.mxu0 0
    %682 = vmatpush1.bf16.msra.mxu0 0
    %683 = vmatprep.mubr.bf16.mxu0 0
    %684 = vmatmul.mubr.bf16.gmra.mrb[0].mxu0 %v650
    %v685 = vpop.f32.mrb[0].mxu0
    %v686 = vadd.f32 %v561, %v685
    %v687 = vpop.f32.mrb[0].mxu0
    %v688 = vpop.f32.mrb[0].mxu0
    %v689 = vpop.f32.mrb[0].mxu0
    %690 = vdwg.mxu0
    %v691 = vmul.f32 %v645, 0.2
    %v692 = vmax.f32 %v645, %v691
    %v693 = vmul.f32 %v686, 0.2
    %v694 = vmax.f32 %v686, %v693
    %s695 = scalar_lea.vmem [#allocation5], 256
    %v696 = vld [vmem:[%s695] sm:$0xf]
    %v697 = vld [vmem:[%s695 + $0x4] sm:$0xf]
    %v698 = vld [vmem:[%s695 + $0x8] sm:$0xf]
    %v699 = vld [vmem:[%s695 + $0xc] sm:$0xf]
    %v700 = vld [vmem:[%s695 + $0x10] sm:$0xf]
    %v701 = vld [vmem:[%s695 + $0x14] sm:$0xf]
    %v702 = vld [vmem:[%s695 + $0x18] sm:$0xf]
    %v703 = vld [vmem:[%s695 + $0x1c] sm:$0xf]
    %v704 = vld [vmem:[%s695 + $0x20] sm:$0xf]
    %v705 = vld [vmem:[%s695 + $0x24] sm:$0xf]
    %v706 = vld [vmem:[%s695 + $0x28] sm:$0xf]
    %v707 = vld [vmem:[%s695 + $0x2c] sm:$0xf]
    %v708 = vld [vmem:[%s695 + $0x30] sm:$0xf]
    %v709 = vld [vmem:[%s695 + $0x34] sm:$0xf]
    %v710 = vld [vmem:[%s695 + $0x38] sm:$0xf]
    %v711 = vld [vmem:[%s695 + $0x3c] sm:$0xf]
    %v712 = vld [vmem:[#allocation7 + $0x4] sm:$0x1]
    %v713 = vpack.c.bf16 %v692, %v692
    %v714 = vlaneseq
    %v715 = vshrl.u32 %v714, 7
    %v716 = vsub.s32 0, %v715
    %v717 = vrot.slane %v712, %v716
    %v734 = vunpack.c.l.b16 %v696
    %v735 = vunpack.c.l.b16 %v697
    %v736 = vunpack.c.l.b16 %v698
    %v737 = vunpack.c.l.b16 %v699
    %v738 = vunpack.c.l.b16 %v700
    %v739 = vunpack.c.l.b16 %v701
    %v740 = vunpack.c.l.b16 %v702
    %v741 = vunpack.c.l.b16 %v703
    %v742 = vunpack.c.l.b16 %v704
    %v743 = vunpack.c.l.b16 %v705
    %v744 = vunpack.c.l.b16 %v706
    %v745 = vunpack.c.l.b16 %v707
    %v746 = vunpack.c.l.b16 %v708
    %v747 = vunpack.c.l.b16 %v709
    %v748 = vunpack.c.l.b16 %v710
    %v749 = vunpack.c.l.b16 %v711
    %v750 = vpack.c.b16 %v735, %v734
    %v751 = vpack.c.b16 %v737, %v736
    %v752 = vpack.c.b16 %v739, %v738
    %v753 = vpack.c.b16 %v741, %v740
    %v754 = vpack.c.b16 %v743, %v742
    %v755 = vpack.c.b16 %v745, %v744
    %v756 = vpack.c.b16 %v747, %v746
    %v757 = vpack.c.b16 %v749, %v748
    %766 = vmatprep.subr.bf16.mxu0 0
    %767 = vmatpush1.bf16.msra.mxu0 %v750
    %768 = vmatprep.subr.bf16.mxu0 0
    %769 = vmatpush1.bf16.msra.mxu0 %v751
    %770 = vmatprep.subr.bf16.mxu0 0
    %771 = vmatpush1.bf16.msra.mxu0 %v752
    %772 = vmatprep.subr.bf16.mxu0 0
    %773 = vmatpush1.bf16.msra.mxu0 %v753
    %774 = vmatprep.subr.bf16.mxu0 0
    %775 = vmatpush1.bf16.msra.mxu0 %v754
    %776 = vmatprep.subr.bf16.mxu0 0
    %777 = vmatpush1.bf16.msra.mxu0 %v755
    %778 = vmatprep.subr.bf16.mxu0 0
    %779 = vmatpush1.bf16.msra.mxu0 %v756
    %780 = vmatprep.subr.bf16.mxu0 0
    %781 = vmatpush1.bf16.msra.mxu0 %v757
    %782 = vmatprep.subr.bf16.mxu0 0
    %783 = vmatpush1.bf16.msra.mxu0 0
    %784 = vmatprep.subr.bf16.mxu0 0
    %785 = vmatpush1.bf16.msra.mxu0 0
    %786 = vmatprep.subr.bf16.mxu0 0
    %787 = vmatpush1.bf16.msra.mxu0 0
    %788 = vmatprep.subr.bf16.mxu0 0
    %789 = vmatpush1.bf16.msra.mxu0 0
    %790 = vmatprep.subr.bf16.mxu0 0
    %791 = vmatpush1.bf16.msra.mxu0 0
    %792 = vmatprep.subr.bf16.mxu0 0
    %793 = vmatpush1.bf16.msra.mxu0 0
    %794 = vmatprep.subr.bf16.mxu0 0
    %795 = vmatpush1.bf16.msra.mxu0 0
    %796 = vmatprep.subr.bf16.mxu0 0
    %797 = vmatpush1.bf16.msra.mxu0 0
    %798 = vmatprep.mubr.bf16.mxu0 0
    %799 = vmatmul.mubr.bf16.gmra.mrb[0].mxu0 %v713
    %v800 = vpop.f32.mrb[0].mxu0
    %v801 = vadd.f32 %v717, %v800
    %v802 = vpop.f32.mrb[0].mxu0
    %v803 = vpop.f32.mrb[0].mxu0
    %v804 = vpop.f32.mrb[0].mxu0
    %805 = vdwg.mxu0
    %v806 = vpack.c.bf16 %v694, %v694
    %807 = vmatprep.subr.bf16.mxu0 0
    %808 = vmatpush1.bf16.msra.mxu0 %v750
    %809 = vmatprep.subr.bf16.mxu0 0
    %810 = vmatpush1.bf16.msra.mxu0 %v751
    %811 = vmatprep.subr.bf16.mxu0 0
    %812 = vmatpush1.bf16.msra.mxu0 %v752
    %813 = vmatprep.subr.bf16.mxu0 0
    %814 = vmatpush1.bf16.msra.mxu0 %v753
    %815 = vmatprep.subr.bf16.mxu0 0
    %816 = vmatpush1.bf16.msra.mxu0 %v754
    %817 = vmatprep.subr.bf16.mxu0 0
    %818 = vmatpush1.bf16.msra.mxu0 %v755
    %819 = vmatprep.subr.bf16.mxu0 0
    %820 = vmatpush1.bf16.msra.mxu0 %v756
    %821 = vmatprep.subr.bf16.mxu0 0
    %822 = vmatpush1.bf16.msra.mxu0 %v757
    %823 = vmatprep.subr.bf16.mxu0 0
    %824 = vmatpush1.bf16.msra.mxu0 0
    %825 = vmatprep.subr.bf16.mxu0 0
    %826 = vmatpush1.bf16.msra.mxu0 0
    %827 = vmatprep.subr.bf16.mxu0 0
    %828 = vmatpush1.bf16.msra.mxu0 0
    %829 = vmatprep.subr.bf16.mxu0 0
    %830 = vmatpush1.bf16.msra.mxu0 0
    %831 = vmatprep.subr.bf16.mxu0 0
    %832 = vmatpush1.bf16.msra.mxu0 0
    %833 = vmatprep.subr.bf16.mxu0 0
    %834 = vmatpush1.bf16.msra.mxu0 0
    %835 = vmatprep.subr.bf16.mxu0 0
    %836 = vmatpush1.bf16.msra.mxu0 0
    %837 = vmatprep.subr.bf16.mxu0 0
    %838 = vmatpush1.bf16.msra.mxu0 0
    %839 = vmatprep.mubr.bf16.mxu0 0
    %840 = vmatmul.mubr.bf16.gmra.mrb[0].mxu0 %v806
    %v841 = vpop.f32.mrb[0].mxu0
    %v842 = vadd.f32 %v717, %v841
    %v843 = vpop.f32.mrb[0].mxu0
    %v844 = vpop.f32.mrb[0].mxu0
    %v845 = vpop.f32.mrb[0].mxu0
    %846 = vdwg.mxu0
    %v847 = vmul.f32 %v801, 0.2
    %v848 = vmax.f32 %v801, %v847
    %v849 = vmul.f32 %v842, 0.2
    %v850 = vmax.f32 %v842, %v849
    %s851 = scalar_lea.vmem [#allocation5], 320
    %v852 = vld [vmem:[%s851] sm:$0xf]
    %v853 = vld [vmem:[%s851 + $0x4] sm:$0xf]
    %v854 = vld [vmem:[%s851 + $0x8] sm:$0xf]
    %v855 = vld [vmem:[%s851 + $0xc] sm:$0xf]
    %v856 = vld [vmem:[%s851 + $0x10] sm:$0xf]
    %v857 = vld [vmem:[%s851 + $0x14] sm:$0xf]
    %v858 = vld [vmem:[%s851 + $0x18] sm:$0xf]
    %v859 = vld [vmem:[%s851 + $0x1c] sm:$0xf]
    %v860 = vld [vmem:[%s851 + $0x20] sm:$0xf]
    %v861 = vld [vmem:[%s851 + $0x24] sm:$0xf]
    %v862 = vld [vmem:[%s851 + $0x28] sm:$0xf]
    %v863 = vld [vmem:[%s851 + $0x2c] sm:$0xf]
    %v864 = vld [vmem:[%s851 + $0x30] sm:$0xf]
    %v865 = vld [vmem:[%s851 + $0x34] sm:$0xf]
    %v866 = vld [vmem:[%s851 + $0x38] sm:$0xf]
    %v867 = vld [vmem:[%s851 + $0x3c] sm:$0xf]
    %v868 = vld [vmem:[#allocation7 + $0x5] sm:$0x1]
    %v869 = vpack.c.bf16 %v848, %v848
    %v870 = vlaneseq
    %v871 = vshrl.u32 %v870, 7
    %v872 = vsub.s32 0, %v871
    %v873 = vrot.slane %v868, %v872
    %v890 = vunpack.c.l.b16 %v852
    %v891 = vunpack.c.l.b16 %v853
    %v892 = vunpack.c.l.b16 %v854
    %v893 = vunpack.c.l.b16 %v855
    %v894 = vunpack.c.l.b16 %v856
    %v895 = vunpack.c.l.b16 %v857
    %v896 = vunpack.c.l.b16 %v858
    %v897 = vunpack.c.l.b16 %v859
    %v898 = vunpack.c.l.b16 %v860
    %v899 = vunpack.c.l.b16 %v861
    %v900 = vunpack.c.l.b16 %v862
    %v901 = vunpack.c.l.b16 %v863
    %v902 = vunpack.c.l.b16 %v864
    %v903 = vunpack.c.l.b16 %v865
    %v904 = vunpack.c.l.b16 %v866
    %v905 = vunpack.c.l.b16 %v867
    %v906 = vpack.c.b16 %v891, %v890
    %v907 = vpack.c.b16 %v893, %v892
    %v908 = vpack.c.b16 %v895, %v894
    %v909 = vpack.c.b16 %v897, %v896
    %v910 = vpack.c.b16 %v899, %v898
    %v911 = vpack.c.b16 %v901, %v900
    %v912 = vpack.c.b16 %v903, %v902
    %v913 = vpack.c.b16 %v905, %v904
    %922 = vmatprep.subr.bf16.mxu0 0
    %923 = vmatpush1.bf16.msra.mxu0 %v906
    %924 = vmatprep.subr.bf16.mxu0 0
    %925 = vmatpush1.bf16.msra.mxu0 %v907
    %926 = vmatprep.subr.bf16.mxu0 0
    %927 = vmatpush1.bf16.msra.mxu0 %v908
    %928 = vmatprep.subr.bf16.mxu0 0
    %929 = vmatpush1.bf16.msra.mxu0 %v909
    %930 = vmatprep.subr.bf16.mxu0 0
    %931 = vmatpush1.bf16.msra.mxu0 %v910
    %932 = vmatprep.subr.bf16.mxu0 0
    %933 = vmatpush1.bf16.msra.mxu0 %v911
    %934 = vmatprep.subr.bf16.mxu0 0
    %935 = vmatpush1.bf16.msra.mxu0 %v912
    %936 = vmatprep.subr.bf16.mxu0 0
    %937 = vmatpush1.bf16.msra.mxu0 %v913
    %938 = vmatprep.subr.bf16.mxu0 0
    %939 = vmatpush1.bf16.msra.mxu0 0
    %940 = vmatprep.subr.bf16.mxu0 0
    %941 = vmatpush1.bf16.msra.mxu0 0
    %942 = vmatprep.subr.bf16.mxu0 0
    %943 = vmatpush1.bf16.msra.mxu0 0
    %944 = vmatprep.subr.bf16.mxu0 0
    %945 = vmatpush1.bf16.msra.mxu0 0
    %946 = vmatprep.subr.bf16.mxu0 0
    %947 = vmatpush1.bf16.msra.mxu0 0
    %948 = vmatprep.subr.bf16.mxu0 0
    %949 = vmatpush1.bf16.msra.mxu0 0
    %950 = vmatprep.subr.bf16.mxu0 0
    %951 = vmatpush1.bf16.msra.mxu0 0
    %952 = vmatprep.subr.bf16.mxu0 0
    %953 = vmatpush1.bf16.msra.mxu0 0
    %954 = vmatprep.mubr.bf16.mxu0 0
    %955 = vmatmul.mubr.bf16.gmra.mrb[0].mxu0 %v869
    %v956 = vpop.f32.mrb[0].mxu0
    %v957 = vadd.f32 %v873, %v956
    %v958 = vpop.f32.mrb[0].mxu0
    %v959 = vpop.f32.mrb[0].mxu0
    %v960 = vpop.f32.mrb[0].mxu0
    %961 = vdwg.mxu0
    %v962 = vpack.c.bf16 %v850, %v850
    %963 = vmatprep.subr.bf16.mxu0 0
    %964 = vmatpush1.bf16.msra.mxu0 %v906
    %965 = vmatprep.subr.bf16.mxu0 0
    %966 = vmatpush1.bf16.msra.mxu0 %v907
    %967 = vmatprep.subr.bf16.mxu0 0
    %968 = vmatpush1.bf16.msra.mxu0 %v908
    %969 = vmatprep.subr.bf16.mxu0 0
    %970 = vmatpush1.bf16.msra.mxu0 %v909
    %971 = vmatprep.subr.bf16.mxu0 0
    %972 = vmatpush1.bf16.msra.mxu0 %v910
    %973 = vmatprep.subr.bf16.mxu0 0
    %974 = vmatpush1.bf16.msra.mxu0 %v911
    %975 = vmatprep.subr.bf16.mxu0 0
    %976 = vmatpush1.bf16.msra.mxu0 %v912
    %977 = vmatprep.subr.bf16.mxu0 0
    %978 = vmatpush1.bf16.msra.mxu0 %v913
    %979 = vmatprep.subr.bf16.mxu0 0
    %980 = vmatpush1.bf16.msra.mxu0 0
    %981 = vmatprep.subr.bf16.mxu0 0
    %982 = vmatpush1.bf16.msra.mxu0 0
    %983 = vmatprep.subr.bf16.mxu0 0
    %984 = vmatpush1.bf16.msra.mxu0 0
    %985 = vmatprep.subr.bf16.mxu0 0
    %986 = vmatpush1.bf16.msra.mxu0 0
    %987 = vmatprep.subr.bf16.mxu0 0
    %988 = vmatpush1.bf16.msra.mxu0 0
    %989 = vmatprep.subr.bf16.mxu0 0
    %990 = vmatpush1.bf16.msra.mxu0 0
    %991 = vmatprep.subr.bf16.mxu0 0
    %992 = vmatpush1.bf16.msra.mxu0 0
    %993 = vmatprep.subr.bf16.mxu0 0
    %994 = vmatpush1.bf16.msra.mxu0 0
    %995 = vmatprep.mubr.bf16.mxu0 0
    %996 = vmatmul.mubr.bf16.gmra.mrb[0].mxu0 %v962
    %v997 = vpop.f32.mrb[0].mxu0
    %v998 = vadd.f32 %v873, %v997
    %v999 = vpop.f32.mrb[0].mxu0
    %v1000 = vpop.f32.mrb[0].mxu0
    %v1001 = vpop.f32.mrb[0].mxu0
    %1002 = vdwg.mxu0
    %v1003 = vmul.f32 %v957, 0.2
    %v1004 = vmax.f32 %v957, %v1003
    %v1005 = vmul.f32 %v998, 0.2
    %v1006 = vmax.f32 %v998, %v1005
    %s1007 = scalar_lea.vmem [#allocation5], 384
    %v1008 = vld [vmem:[%s1007] sm:$0xf]
    %v1009 = vld [vmem:[%s1007 + $0x4] sm:$0xf]
    %v1010 = vld [vmem:[%s1007 + $0x8] sm:$0xf]
    %v1011 = vld [vmem:[%s1007 + $0xc] sm:$0xf]
    %v1012 = vld [vmem:[%s1007 + $0x10] sm:$0xf]
    %v1013 = vld [vmem:[%s1007 + $0x14] sm:$0xf]
    %v1014 = vld [vmem:[%s1007 + $0x18] sm:$0xf]
    %v1015 = vld [vmem:[%s1007 + $0x1c] sm:$0xf]
    %v1016 = vld [vmem:[%s1007 + $0x20] sm:$0xf]
    %v1017 = vld [vmem:[%s1007 + $0x24] sm:$0xf]
    %v1018 = vld [vmem:[%s1007 + $0x28] sm:$0xf]
    %v1019 = vld [vmem:[%s1007 + $0x2c] sm:$0xf]
    %v1020 = vld [vmem:[%s1007 + $0x30] sm:$0xf]
    %v1021 = vld [vmem:[%s1007 + $0x34] sm:$0xf]
    %v1022 = vld [vmem:[%s1007 + $0x38] sm:$0xf]
    %v1023 = vld [vmem:[%s1007 + $0x3c] sm:$0xf]
    %v1024 = vld [vmem:[#allocation7 + $0x6] sm:$0x1]
    %v1025 = vpack.c.bf16 %v1004, %v1004
    %v1026 = vlaneseq
    %v1027 = vshrl.u32 %v1026, 7
    %v1028 = vsub.s32 0, %v1027
    %v1029 = vrot.slane %v1024, %v1028
    %v1046 = vunpack.c.l.b16 %v1008
    %v1047 = vunpack.c.l.b16 %v1009
    %v1048 = vunpack.c.l.b16 %v1010
    %v1049 = vunpack.c.l.b16 %v1011
    %v1050 = vunpack.c.l.b16 %v1012
    %v1051 = vunpack.c.l.b16 %v1013
    %v1052 = vunpack.c.l.b16 %v1014
    %v1053 = vunpack.c.l.b16 %v1015
    %v1054 = vunpack.c.l.b16 %v1016
    %v1055 = vunpack.c.l.b16 %v1017
    %v1056 = vunpack.c.l.b16 %v1018
    %v1057 = vunpack.c.l.b16 %v1019
    %v1058 = vunpack.c.l.b16 %v1020
    %v1059 = vunpack.c.l.b16 %v1021
    %v1060 = vunpack.c.l.b16 %v1022
    %v1061 = vunpack.c.l.b16 %v1023
    %v1062 = vpack.c.b16 %v1047, %v1046
    %v1063 = vpack.c.b16 %v1049, %v1048
    %v1064 = vpack.c.b16 %v1051, %v1050
    %v1065 = vpack.c.b16 %v1053, %v1052
    %v1066 = vpack.c.b16 %v1055, %v1054
    %v1067 = vpack.c.b16 %v1057, %v1056
    %v1068 = vpack.c.b16 %v1059, %v1058
    %v1069 = vpack.c.b16 %v1061, %v1060
    %1078 = vmatprep.subr.bf16.mxu0 0
    %1079 = vmatpush1.bf16.msra.mxu0 %v1062
    %1080 = vmatprep.subr.bf16.mxu0 0
    %1081 = vmatpush1.bf16.msra.mxu0 %v1063
    %1082 = vmatprep.subr.bf16.mxu0 0
    %1083 = vmatpush1.bf16.msra.mxu0 %v1064
    %1084 = vmatprep.subr.bf16.mxu0 0
    %1085 = vmatpush1.bf16.msra.mxu0 %v1065
    %1086 = vmatprep.subr.bf16.mxu0 0
    %1087 = vmatpush1.bf16.msra.mxu0 %v1066
    %1088 = vmatprep.subr.bf16.mxu0 0
    %1089 = vmatpush1.bf16.msra.mxu0 %v1067
    %1090 = vmatprep.subr.bf16.mxu0 0
    %1091 = vmatpush1.bf16.msra.mxu0 %v1068
    %1092 = vmatprep.subr.bf16.mxu0 0
    %1093 = vmatpush1.bf16.msra.mxu0 %v1069
    %1094 = vmatprep.subr.bf16.mxu0 0
    %1095 = vmatpush1.bf16.msra.mxu0 0
    %1096 = vmatprep.subr.bf16.mxu0 0
    %1097 = vmatpush1.bf16.msra.mxu0 0
    %1098 = vmatprep.subr.bf16.mxu0 0
    %1099 = vmatpush1.bf16.msra.mxu0 0
    %1100 = vmatprep.subr.bf16.mxu0 0
    %1101 = vmatpush1.bf16.msra.mxu0 0
    %1102 = vmatprep.subr.bf16.mxu0 0
    %1103 = vmatpush1.bf16.msra.mxu0 0
    %1104 = vmatprep.subr.bf16.mxu0 0
    %1105 = vmatpush1.bf16.msra.mxu0 0
    %1106 = vmatprep.subr.bf16.mxu0 0
    %1107 = vmatpush1.bf16.msra.mxu0 0
    %1108 = vmatprep.subr.bf16.mxu0 0
    %1109 = vmatpush1.bf16.msra.mxu0 0
    %1110 = vmatprep.mubr.bf16.mxu0 0
    %1111 = vmatmul.mubr.bf16.gmra.mrb[0].mxu0 %v1025
    %v1112 = vpop.f32.mrb[0].mxu0
    %v1113 = vadd.f32 %v1029, %v1112
    %v1114 = vpop.f32.mrb[0].mxu0
    %v1115 = vpop.f32.mrb[0].mxu0
    %v1116 = vpop.f32.mrb[0].mxu0
    %1117 = vdwg.mxu0
    %v1118 = vpack.c.bf16 %v1006, %v1006
    %1119 = vmatprep.subr.bf16.mxu0 0
    %1120 = vmatpush1.bf16.msra.mxu0 %v1062
    %1121 = vmatprep.subr.bf16.mxu0 0
    %1122 = vmatpush1.bf16.msra.mxu0 %v1063
    %1123 = vmatprep.subr.bf16.mxu0 0
    %1124 = vmatpush1.bf16.msra.mxu0 %v1064
    %1125 = vmatprep.subr.bf16.mxu0 0
    %1126 = vmatpush1.bf16.msra.mxu0 %v1065
    %1127 = vmatprep.subr.bf16.mxu0 0
    %1128 = vmatpush1.bf16.msra.mxu0 %v1066
    %1129 = vmatprep.subr.bf16.mxu0 0
    %1130 = vmatpush1.bf16.msra.mxu0 %v1067
    %1131 = vmatprep.subr.bf16.mxu0 0
    %1132 = vmatpush1.bf16.msra.mxu0 %v1068
    %1133 = vmatprep.subr.bf16.mxu0 0
    %1134 = vmatpush1.bf16.msra.mxu0 %v1069
    %1135 = vmatprep.subr.bf16.mxu0 0
    %1136 = vmatpush1.bf16.msra.mxu0 0
    %1137 = vmatprep.subr.bf16.mxu0 0
    %1138 = vmatpush1.bf16.msra.mxu0 0
    %1139 = vmatprep.subr.bf16.mxu0 0
    %1140 = vmatpush1.bf16.msra.mxu0 0
    %1141 = vmatprep.subr.bf16.mxu0 0
    %1142 = vmatpush1.bf16.msra.mxu0 0
    %1143 = vmatprep.subr.bf16.mxu0 0
    %1144 = vmatpush1.bf16.msra.mxu0 0
    %1145 = vmatprep.subr.bf16.mxu0 0
    %1146 = vmatpush1.bf16.msra.mxu0 0
    %1147 = vmatprep.subr.bf16.mxu0 0
    %1148 = vmatpush1.bf16.msra.mxu0 0
    %1149 = vmatprep.subr.bf16.mxu0 0
    %1150 = vmatpush1.bf16.msra.mxu0 0
    %1151 = vmatprep.mubr.bf16.mxu0 0
    %1152 = vmatmul.mubr.bf16.gmra.mrb[0].mxu0 %v1118
    %v1153 = vpop.f32.mrb[0].mxu0
    %v1154 = vadd.f32 %v1029, %v1153
    %v1155 = vpop.f32.mrb[0].mxu0
    %v1156 = vpop.f32.mrb[0].mxu0
    %v1157 = vpop.f32.mrb[0].mxu0
    %1158 = vdwg.mxu0
    %v1159 = vmul.f32 %v1113, 0.2
    %v1160 = vmax.f32 %v1113, %v1159
    %v1161 = vmul.f32 %v1154, 0.2
    %v1162 = vmax.f32 %v1154, %v1161
    %s1163 = scalar_lea.vmem [#allocation5], 448
    %v1164 = vld [vmem:[%s1163] sm:$0xf]
    %v1165 = vld [vmem:[%s1163 + $0x4] sm:$0xf]
    %v1166 = vld [vmem:[%s1163 + $0x8] sm:$0xf]
    %v1167 = vld [vmem:[%s1163 + $0xc] sm:$0xf]
    %v1168 = vld [vmem:[%s1163 + $0x10] sm:$0xf]
    %v1169 = vld [vmem:[%s1163 + $0x14] sm:$0xf]
    %v1170 = vld [vmem:[%s1163 + $0x18] sm:$0xf]
    %v1171 = vld [vmem:[%s1163 + $0x1c] sm:$0xf]
    %v1172 = vld [vmem:[%s1163 + $0x20] sm:$0xf]
    %v1173 = vld [vmem:[%s1163 + $0x24] sm:$0xf]
    %v1174 = vld [vmem:[%s1163 + $0x28] sm:$0xf]
    %v1175 = vld [vmem:[%s1163 + $0x2c] sm:$0xf]
    %v1176 = vld [vmem:[%s1163 + $0x30] sm:$0xf]
    %v1177 = vld [vmem:[%s1163 + $0x34] sm:$0xf]
    %v1178 = vld [vmem:[%s1163 + $0x38] sm:$0xf]
    %v1179 = vld [vmem:[%s1163 + $0x3c] sm:$0xf]
    %v1180 = vld [vmem:[#allocation7 + $0x7] sm:$0x1]
    %v1181 = vpack.c.bf16 %v1160, %v1160
    %v1182 = vlaneseq
    %v1183 = vshrl.u32 %v1182, 7
    %v1184 = vsub.s32 0, %v1183
    %v1185 = vrot.slane %v1180, %v1184
    %v1202 = vunpack.c.l.b16 %v1164
    %v1203 = vunpack.c.l.b16 %v1165
    %v1204 = vunpack.c.l.b16 %v1166
    %v1205 = vunpack.c.l.b16 %v1167
    %v1206 = vunpack.c.l.b16 %v1168
    %v1207 = vunpack.c.l.b16 %v1169
    %v1208 = vunpack.c.l.b16 %v1170
    %v1209 = vunpack.c.l.b16 %v1171
    %v1210 = vunpack.c.l.b16 %v1172
    %v1211 = vunpack.c.l.b16 %v1173
    %v1212 = vunpack.c.l.b16 %v1174
    %v1213 = vunpack.c.l.b16 %v1175
    %v1214 = vunpack.c.l.b16 %v1176
    %v1215 = vunpack.c.l.b16 %v1177
    %v1216 = vunpack.c.l.b16 %v1178
    %v1217 = vunpack.c.l.b16 %v1179
    %v1218 = vpack.c.b16 %v1203, %v1202
    %v1219 = vpack.c.b16 %v1205, %v1204
    %v1220 = vpack.c.b16 %v1207, %v1206
    %v1221 = vpack.c.b16 %v1209, %v1208
    %v1222 = vpack.c.b16 %v1211, %v1210
    %v1223 = vpack.c.b16 %v1213, %v1212
    %v1224 = vpack.c.b16 %v1215, %v1214
    %v1225 = vpack.c.b16 %v1217, %v1216
    %1234 = vmatprep.subr.bf16.mxu0 0
    %1235 = vmatpush1.bf16.msra.mxu0 %v1218
    %1236 = vmatprep.subr.bf16.mxu0 0
    %1237 = vmatpush1.bf16.msra.mxu0 %v1219
    %1238 = vmatprep.subr.bf16.mxu0 0
    %1239 = vmatpush1.bf16.msra.mxu0 %v1220
    %1240 = vmatprep.subr.bf16.mxu0 0
    %1241 = vmatpush1.bf16.msra.mxu0 %v1221
    %1242 = vmatprep.subr.bf16.mxu0 0
    %1243 = vmatpush1.bf16.msra.mxu0 %v1222
    %1244 = vmatprep.subr.bf16.mxu0 0
    %1245 = vmatpush1.bf16.msra.mxu0 %v1223
    %1246 = vmatprep.subr.bf16.mxu0 0
    %1247 = vmatpush1.bf16.msra.mxu0 %v1224
    %1248 = vmatprep.subr.bf16.mxu0 0
    %1249 = vmatpush1.bf16.msra.mxu0 %v1225
    %1250 = vmatprep.subr.bf16.mxu0 0
    %1251 = vmatpush1.bf16.msra.mxu0 0
    %1252 = vmatprep.subr.bf16.mxu0 0
    %1253 = vmatpush1.bf16.msra.mxu0 0
    %1254 = vmatprep.subr.bf16.mxu0 0
    %1255 = vmatpush1.bf16.msra.mxu0 0
    %1256 = vmatprep.subr.bf16.mxu0 0
    %1257 = vmatpush1.bf16.msra.mxu0 0
    %1258 = vmatprep.subr.bf16.mxu0 0
    %1259 = vmatpush1.bf16.msra.mxu0 0
    %1260 = vmatprep.subr.bf16.mxu0 0
    %1261 = vmatpush1.bf16.msra.mxu0 0
    %1262 = vmatprep.subr.bf16.mxu0 0
    %1263 = vmatpush1.bf16.msra.mxu0 0
    %1264 = vmatprep.subr.bf16.mxu0 0
    %1265 = vmatpush1.bf16.msra.mxu0 0
    %1266 = vmatprep.mubr.bf16.mxu0 0
    %1267 = vmatmul.mubr.bf16.gmra.mrb[0].mxu0 %v1181
    %v1268 = vpop.f32.mrb[0].mxu0
    %v1269 = vadd.f32 %v1185, %v1268
    %v1270 = vpop.f32.mrb[0].mxu0
    %v1271 = vpop.f32.mrb[0].mxu0
    %v1272 = vpop.f32.mrb[0].mxu0
    %1273 = vdwg.mxu0
    %v1274 = vpack.c.bf16 %v1162, %v1162
    %1275 = vmatprep.subr.bf16.mxu0 0
    %1276 = vmatpush1.bf16.msra.mxu0 %v1218
    %1277 = vmatprep.subr.bf16.mxu0 0
    %1278 = vmatpush1.bf16.msra.mxu0 %v1219
    %1279 = vmatprep.subr.bf16.mxu0 0
    %1280 = vmatpush1.bf16.msra.mxu0 %v1220
    %1281 = vmatprep.subr.bf16.mxu0 0
    %1282 = vmatpush1.bf16.msra.mxu0 %v1221
    %1283 = vmatprep.subr.bf16.mxu0 0
    %1284 = vmatpush1.bf16.msra.mxu0 %v1222
    %1285 = vmatprep.subr.bf16.mxu0 0
    %1286 = vmatpush1.bf16.msra.mxu0 %v1223
    %1287 = vmatprep.subr.bf16.mxu0 0
    %1288 = vmatpush1.bf16.msra.mxu0 %v1224
    %1289 = vmatprep.subr.bf16.mxu0 0
    %1290 = vmatpush1.bf16.msra.mxu0 %v1225
    %1291 = vmatprep.subr.bf16.mxu0 0
    %1292 = vmatpush1.bf16.msra.mxu0 0
    %1293 = vmatprep.subr.bf16.mxu0 0
    %1294 = vmatpush1.bf16.msra.mxu0 0
    %1295 = vmatprep.subr.bf16.mxu0 0
    %1296 = vmatpush1.bf16.msra.mxu0 0
    %1297 = vmatprep.subr.bf16.mxu0 0
    %1298 = vmatpush1.bf16.msra.mxu0 0
    %1299 = vmatprep.subr.bf16.mxu0 0
    %1300 = vmatpush1.bf16.msra.mxu0 0
    %1301 = vmatprep.subr.bf16.mxu0 0
    %1302 = vmatpush1.bf16.msra.mxu0 0
    %1303 = vmatprep.subr.bf16.mxu0 0
    %1304 = vmatpush1.bf16.msra.mxu0 0
    %1305 = vmatprep.subr.bf16.mxu0 0
    %1306 = vmatpush1.bf16.msra.mxu0 0
    %1307 = vmatprep.mubr.bf16.mxu0 0
    %1308 = vmatmul.mubr.bf16.gmra.mrb[0].mxu0 %v1274
    %v1309 = vpop.f32.mrb[0].mxu0
    %v1310 = vadd.f32 %v1185, %v1309
    %v1311 = vpop.f32.mrb[0].mxu0
    %v1312 = vpop.f32.mrb[0].mxu0
    %v1313 = vpop.f32.mrb[0].mxu0
    %1314 = vdwg.mxu0
    %v1315 = vmul.f32 %v1269, 0.2
    %v1316 = vmax.f32 %v1269, %v1315
    %v1317 = vmul.f32 %v1310, 0.2
    %v1318 = vmax.f32 %v1310, %v1317
    %1319 = vst [vmem:[#allocation8] sm:$0xff] %v1316
    %1320 = vst [vmem:[#allocation8 + $0x8] sm:$0xff] %v1318
    // Predicated region
    $region26: #{tpu_custom_call.1} parent=1 // pred_check
      _
    $region27: #{tpu_custom_call.1} parent=1 // pred_check_branch
      %1322 = sbr.rel (0) target = $region29
    $region28: #{tpu_custom_call.1} parent=1 // pred_region
      %s1324 = ssub.s32 256, 256
      %1325 = vsyncadd [#allocation4], %s1324
      %s1326 = sshll.u32 [#allocation8], 4
      %s1327 = int_to_ptr.vmem [resolvable:$true] %s1326
      %1332 = dma.vmem_to_hbm [thread:$0]  %s1327, 256, %s3, [#allocation4], 128, 128, 8
    $region29: #{tpu_custom_call.1} parent=1 // pred_fallthru
      _
    // Predicated region
    $region30: #{tpu_custom_call.1} parent=1 // pred_check
      _
    $region31: #{tpu_custom_call.1} parent=1 // pred_check_branch
      %1334 = sbr.rel (0) target = $region33
    $region32: #{tpu_custom_call.1} parent=1 // pred_region
      %1335 = dma.done [#allocation4], 256
    $region33: #{tpu_custom_call.1} parent=1 // pred_fallthru
      _
    %1336 = vsyncpa [#allocation3], 1
    %1337 = vsyncpa [#allocation6], 1
    %1338 = vsyncpa [#allocation4], 1

</llo_original>
